<compile_context>
chip_gen: v7x
topology: tpu7x:2x2x1
jax: 0.10.0
libtpu: 0.0.40
codegen_flags: <defaults>
</compile_context>

<pallas_src>
import functools

import jax
import jax.numpy as jnp
from jax.experimental import pallas as pl
from jax.experimental.pallas import tpu as pltpu


def _layernorm(x, g, b, eps=1e-5):
    mu = jnp.mean(x, axis=-1, keepdims=True)
    var = jnp.mean((x - mu) ** 2, axis=-1, keepdims=True)
    return (x - mu) * jax.lax.rsqrt(var + eps) * g + b


def gsa_encoder_kernel(heads,
                       x_ref, a_ref, aphi_ref,
                       w1_ref, b1_ref, w2_ref, b2_ref,
                       g1_ref, be1_ref,
                       wq_ref, bq_ref, wk_ref, bk_ref, wv_ref, bv_ref,
                       wout_ref, bout_ref,
                       g2_ref, be2_ref,
                       wf1_ref, bf1_ref, wf2_ref, bf2_ref,
                       g3_ref, be3_ref,
                       o_ref):
    f32 = jnp.float32
    bf16 = jnp.bfloat16

    xb = x_ref[...]                                   # (Bb, N, D) f32
    Bb, N, D = xb.shape
    hd = D // heads
    BH = heads * Bb

    # --- GCN symmetric normalization, adjacency pre-scaled ONCE for both layers:
    #     A_norm = d_i (A + I)_ij d_j  ->  prop(t) = A_sc @ t + d^2 * t
    A_f = a_ref[...].astype(f32)                      # (Bb, N, N)
    deg = jnp.sum(A_f, axis=-1, keepdims=True) + 1.0  # self-loop folded in; deg >= 1
    d = jax.lax.rsqrt(deg)                            # (Bb, N, 1)
    d2 = d * d
    A_sc = (d * A_f * jnp.swapaxes(d, -1, -2)).astype(bf16)   # (Bb, N, N) bf16

    def gcn_prop(t):                                  # t: (Bb, N, D) f32
        return jnp.einsum('bnm,bmd->bnd', A_sc, t.astype(bf16),
                          preferred_element_type=f32) + d2 * t

    x2d = xb.reshape(Bb * N, D)

    # --- GCN 1 + ReLU (weights pre-transposed to (in, out), bf16)
    h = gcn_prop(xb).reshape(Bb * N, D)
    h = jnp.dot(h.astype(bf16), w1_ref[...], preferred_element_type=f32) + b1_ref[...]
    h = jnp.maximum(h, 0.0)

    # --- GCN 2
    h = gcn_prop(h.reshape(Bb, N, D)).reshape(Bb * N, D)
    h = jnp.dot(h.astype(bf16), w2_ref[...], preferred_element_type=f32) + b2_ref[...]

    x1 = _layernorm(x2d + h, g1_ref[...], be1_ref[...])          # (Bb*N, D) f32

    # --- Graph structure-aware multi-head attention (batched over heads*Bb).
    # Attention scale pre-folded into Wq/bq; gamma pre-folded into A_phi.
    x1b = x1.astype(bf16)
    q = jnp.dot(x1b, wq_ref[...], preferred_element_type=f32) + bq_ref[...]
    k = jnp.dot(x1b, wk_ref[...], preferred_element_type=f32) + bk_ref[...]
    v = jnp.dot(x1b, wv_ref[...], preferred_element_type=f32) + bv_ref[...]

    def split_heads(t):                               # (Bb*N, D) -> (heads*Bb, N, hd) bf16
        t3 = t.astype(bf16).reshape(Bb, N, D)
        parts = [t3[:, :, hh * hd:(hh + 1) * hd] for hh in range(heads)]   # static lane slices
        return jnp.stack(parts, axis=0).reshape(BH, N, hd)

    qh, kh, vh = split_heads(q), split_heads(k), split_heads(v)

    # gamma already folded into A_phi on the host; broadcast bias over heads once.
    bias = aphi_ref[...].astype(f32)                  # (Bb, N, N)
    bias = jnp.broadcast_to(bias[None], (heads, Bb, N, N)).reshape(BH, N, N)

    s = jnp.einsum('xnd,xmd->xnm', qh, kh, preferred_element_type=f32) + bias
    s = s - jnp.max(s, axis=-1, keepdims=True)
    p = jnp.exp(s)
    p = p * pl.reciprocal(jnp.sum(p, axis=-1, keepdims=True), approx=True)

    oh = jnp.einsum('xnm,xmd->xnd', p.astype(bf16), vh,
                    preferred_element_type=f32)       # (heads*Bb, N, hd)
    oh = oh.reshape(heads, Bb * N, hd)
    cat = jnp.concatenate([oh[hh] for hh in range(heads)], axis=-1)   # (Bb*N, D)
    att = jnp.dot(cat.astype(bf16), wout_ref[...],
                  preferred_element_type=f32) + bout_ref[...]

    x2 = _layernorm(x1 + att, g2_ref[...], be2_ref[...])

    # --- FFN.  TODO(synk): dropout(p=0.1) omitted -- eval-mode (identity) semantics.
    f = jnp.dot(x2.astype(bf16), wf1_ref[...], preferred_element_type=f32) + bf1_ref[...]
    f = jnp.maximum(f, 0.0)
    f = jnp.dot(f.astype(bf16), wf2_ref[...], preferred_element_type=f32) + bf2_ref[...]

    x3 = _layernorm(x2 + f, g3_ref[...], be3_ref[...])
    o_ref[...] = x3.reshape(Bb, N, D).astype(o_ref.dtype)
    # TODO(synk): for very large N*Bblk add query-row tiling (lax.fori_loop over
    # 256-512 row chunks) of the attention/FFN sections to bound temp VMEM on v7x.


def _vmem_capacity_bytes():
    try:
        info = pltpu.get_tpu_info()
        return int(getattr(info, "vmem_capacity_bytes", 64 << 20))
    except Exception:  # pragma: no cover - conservative fallback (v7x per-TC VMEM)
        return 64 << 20


def _pick_batch_block(B, N, D, heads, vmem_budget):
    # Pack batch elements per grid step so the flattened (Bblk*N, D) dense slab
    # fills the vregs and the ~0.35us/step grid overhead amortizes, but
    #  (a) cap the per-block VMEM footprint of the big temporaries, and
    #  (b) keep >= 2 grid steps so both TensorCores on a v7x chip get work.
    target_rows = 512
    cand = max(1, min(B, max(1, target_rows // max(N, 1))))
    per_sample = (3 * heads * N * N * 4          # scores / probs / bias (f32)
                  + 2 * N * N * 2 * 2            # A + A_phi blocks (bf16, double-buffered)
                  + 2 * N * 4 * D * 4            # FFN intermediate (f32 + bf16 copy margin)
                  + 14 * N * D * 4)              # x/q/k/v/att/residual temps (f32)
    budget = max(vmem_budget // 3, 4 << 20)
    cand = max(1, min(cand, budget // max(per_sample, 1)))
    if B >= 2:
        cand = min(cand, max(1, B // 2))         # ensure at least 2 grid steps
    while B % cand:
        cand -= 1
    return cand


def gsa_encoder_block(x, A, A_phi, params, heads=4):
    (w1, b1, w2, b2, g1, be1, wqkv, bqkv, wout, bout, gamma,
     g2, be2, wf1, bf1, wf2, bf2, g3, be3) = params
    B, N, D = x.shape
    assert D % heads == 0
    scale = D ** (-0.5)   # full-dim scale, matching the PyTorch module
    bf16 = jnp.bfloat16

    # Host-side one-off weight prep:
    #  * transpose every dense weight to (in, out) and cast to bf16 (MXU operands)
    #  * split the fused QKV projection into Wq / Wk / Wv
    #  * fold the attention scale into the Q projection
    #  * biases / LayerNorm params stay f32 (applied in f32 after accumulation)
    kparams = (
        w1.T.astype(bf16), b1, w2.T.astype(bf16), b2, g1, be1,
        (wqkv[0:D, :].T * scale).astype(bf16), bqkv[:, 0:D] * scale,
        wqkv[D:2 * D, :].T.astype(bf16), bqkv[:, D:2 * D],
        wqkv[2 * D:3 * D, :].T.astype(bf16), bqkv[:, 2 * D:3 * D],
        wout.T.astype(bf16), bout,
        g2, be2,
        wf1.T.astype(bf16), bf1, wf2.T.astype(bf16), bf2,
        g3, be3,
    )

    # Adjacency / structural bias as bf16 (halves their HBM DMA); gamma folded in.
    A_b = A.astype(bf16)
    Aphi_b = (A_phi * gamma[0, 0]).astype(bf16)

    vmem_cap = _vmem_capacity_bytes()
    vmem_budget = (vmem_cap * 7) // 8              # headroom for Mosaic internal scratch
    bblk = _pick_batch_block(B, N, D, heads, vmem_budget)
    grid = (B // bblk,)

    def const_spec(shape):
        nd = len(shape)

        def idx(b, _nd=nd):
            return (0,) * _nd

        try:
            # Constant index_map -> nothing to pipeline; single-buffer the weights
            # so ~half their VMEM footprint is freed (matters on v7x's 64 MiB VMEM).
            return pl.BlockSpec(tuple(shape), idx, pipeline_mode=pl.Buffered(1))
        except (TypeError, AttributeError, ValueError):
            return pl.BlockSpec(tuple(shape), idx)

    def batched_spec(shape):
        return pl.BlockSpec((bblk,) + tuple(shape[1:]), lambda b: (b, 0, 0))

    in_specs = [batched_spec(x.shape), batched_spec(A_b.shape), batched_spec(Aphi_b.shape)]
    in_specs += [const_spec(p.shape) for p in kparams]
    out_spec = pl.BlockSpec((bblk, N, D), lambda b: (b, 0, 0))

    # VMEM budget estimate (weights + double-buffered I/O blocks + live temps).
    weight_bytes = sum(int(p.size) * p.dtype.itemsize for p in kparams)
    io_bytes = 2 * (2 * bblk * N * D * 4) + 2 * (2 * bblk * N * N * 2)
    tmp_bytes = bblk * (3 * heads * N * N * 4 + 2 * N * 4 * D * 4 + 14 * N * D * 4)
    need = 2 * weight_bytes + io_bytes + tmp_bytes
    vmem_limit = int(min(vmem_budget, max(need, min(32 << 20, vmem_budget))))
    # TODO(synk): production shapes with D < 128 or N not a multiple of 8 should be
    # padded (or graphs packed along lanes) on the host for lane-dense stores.

    flops = int(B * N * (8 * N * D + 28 * D * D))
    transcendentals = int(B * heads * N * N + 2 * B * N * N)
    bytes_accessed = int(4 * 2 * B * N * D + 2 * 2 * B * N * N + weight_bytes)
    cost = pl.CostEstimate(flops=flops, transcendentals=transcendentals,
                           bytes_accessed=bytes_accessed)

    kernel = functools.partial(gsa_encoder_kernel, heads)
    return pl.pallas_call(
        kernel,
        out_shape=jax.ShapeDtypeStruct((B, N, D), jnp.float32),
        grid_spec=pltpu.PrefetchScalarGridSpec(
            num_scalar_prefetch=0,
            grid=grid,
            in_specs=in_specs,
            out_specs=out_spec,
        ),
        compiler_params=pltpu.CompilerParams(
            dimension_semantics=("parallel",),
            vmem_limit_bytes=vmem_limit,
        ),
        cost_estimate=cost,
    )(x, A_b, Aphi_b, *kparams)


def make_params(key, dim, heads=4):
    ks = jax.random.split(key, 8)
    s = 0.1
    w1 = jax.random.normal(ks[0], (dim, dim), jnp.float32) * s
    b1 = jax.random.normal(ks[1], (1, dim), jnp.float32) * s
    w2 = jax.random.normal(ks[2], (dim, dim), jnp.float32) * s
    b2 = jax.random.normal(ks[3], (1, dim), jnp.float32) * s
    g1 = jnp.ones((1, dim), jnp.float32)
    be1 = jnp.zeros((1, dim), jnp.float32)
    wqkv = jax.random.normal(ks[4], (3 * dim, dim), jnp.float32) * s
    bqkv = jax.random.normal(ks[5], (1, 3 * dim), jnp.float32) * s
    wout = jax.random.normal(ks[6], (dim, dim), jnp.float32) * s
    bout = jax.random.normal(ks[7], (1, dim), jnp.float32) * s
    gamma = jnp.ones((1, 1), jnp.float32)
    g2 = jnp.ones((1, dim), jnp.float32)
    be2 = jnp.zeros((1, dim), jnp.float32)
    kf = jax.random.split(jax.random.fold_in(key, 7), 4)
    wf1 = jax.random.normal(kf[0], (4 * dim, dim), jnp.float32) * s
    bf1 = jax.random.normal(kf[1], (1, 4 * dim), jnp.float32) * s
    wf2 = jax.random.normal(kf[2], (dim, 4 * dim), jnp.float32) * s
    bf2 = jax.random.normal(kf[3], (1, dim), jnp.float32) * s
    g3 = jnp.ones((1, dim), jnp.float32)
    be3 = jnp.zeros((1, dim), jnp.float32)
    return (w1, b1, w2, b2, g1, be1, wqkv, bqkv, wout, bout, gamma,
            g2, be2, wf1, bf1, wf2, bf2, g3, be3)


def reference(x, A, A_phi, params, heads=4):
    (w1, b1, w2, b2, g1, be1, wqkv, bqkv, wout, bout, gamma,
     g2, be2, wf1, bf1, wf2, bf2, g3, be3) = params
    B, N, D = x.shape

    def ln(t, g, b):
        mu = t.mean(-1, keepdims=True)
        var = ((t - mu) ** 2).mean(-1, keepdims=True)
        return (t - mu) / jnp.sqrt(var + 1e-5) * g + b

    A_hat = A + jnp.eye(N)[None]
    deg = A_hat.sum(-1)
    d = jnp.where(deg > 0, deg ** -0.5, 0.0)
    A_norm = d[..., :, None] * A_hat * d[..., None, :]

    h = jnp.einsum('bnm,bmd->bnd', A_norm, x) @ w1.T + b1
    h = jax.nn.relu(h)
    h = jnp.einsum('bnm,bmd->bnd', A_norm, h) @ w2.T + b2
    x1 = ln(x + h, g1, be1)

    qkv = x1 @ wqkv.T + bqkv
    q, k, v = jnp.split(qkv, 3, axis=-1)
    hd = D // heads

    def to_heads(t):
        return t.reshape(B, N, heads, hd).transpose(0, 2, 1, 3)

    q, k, v = map(to_heads, (q, k, v))
    attn = jnp.einsum('bhnd,bhmd->bhnm', q, k) * (D ** -0.5)
    attn = attn + gamma[0, 0] * A_phi[:, None]
    attn = jax.nn.softmax(attn, axis=-1)
    out = jnp.einsum('bhnm,bhmd->bhnd', attn, v).transpose(0, 2, 1, 3).reshape(B, N, D)
    att = out @ wout.T + bout
    x2 = ln(x1 + att, g2, be2)

    f = jax.nn.relu(x2 @ wf1.T + bf1) @ wf2.T + bf2
    return ln(x2 + f, g3, be3)


if __name__ == "__main__":
    B, N, D, heads = 2, 8, 32, 4
    key = jax.random.PRNGKey(0)
    kx, ka, kp, kw = jax.random.split(key, 4)
    x = jax.random.normal(kx, (B, N, D), jnp.float32)
    # symmetric-ish nonnegative adjacency
    A_raw = jax.random.uniform(ka, (B, N, N), jnp.float32)
    A = (A_raw + jnp.swapaxes(A_raw, -1, -2)) * 0.5
    A_phi = jax.random.normal(kp, (B, N, N), jnp.float32) * 0.5
    params = make_params(kw, D, heads)

    out = gsa_encoder_block(x, A, A_phi, params, heads=heads)
    out = jax.block_until_ready(out)

    ref = reference(x, A, A_phi, params, heads=heads)
    assert out.shape == (B, N, D)
    assert not jnp.any(jnp.isnan(out))
    # bf16 MXU operands / bf16 adjacency inputs / approx softmax reciprocal:
    # compare against the f32 reference with a bf16-appropriate tolerance.
    assert jnp.allclose(out, ref, atol=5e-2, rtol=5e-2), "mismatch vs. JAX reference"
    print("KERNEL_OK")
</pallas_src>

<mosaic_0001>
module attributes {stable_mosaic.version = 11 : i64} {
  func.func @gsa_encoder_kernel(%arg0: i32, %arg1: memref<1x8x32xf32, #tpu.memory_space<vmem>>, %arg2: memref<1x8x8xbf16, #tpu.memory_space<vmem>>, %arg3: memref<1x8x8xbf16, #tpu.memory_space<vmem>>, %arg4: memref<32x32xbf16, #tpu.memory_space<vmem>>, %arg5: memref<1x32xf32, #tpu.memory_space<vmem>>, %arg6: memref<32x32xbf16, #tpu.memory_space<vmem>>, %arg7: memref<1x32xf32, #tpu.memory_space<vmem>>, %arg8: memref<1x32xf32, #tpu.memory_space<vmem>>, %arg9: memref<1x32xf32, #tpu.memory_space<vmem>>, %arg10: memref<32x32xbf16, #tpu.memory_space<vmem>>, %arg11: memref<1x32xf32, #tpu.memory_space<vmem>>, %arg12: memref<32x32xbf16, #tpu.memory_space<vmem>>, %arg13: memref<1x32xf32, #tpu.memory_space<vmem>>, %arg14: memref<32x32xbf16, #tpu.memory_space<vmem>>, %arg15: memref<1x32xf32, #tpu.memory_space<vmem>>, %arg16: memref<32x32xbf16, #tpu.memory_space<vmem>>, %arg17: memref<1x32xf32, #tpu.memory_space<vmem>>, %arg18: memref<1x32xf32, #tpu.memory_space<vmem>>, %arg19: memref<1x32xf32, #tpu.memory_space<vmem>>, %arg20: memref<32x128xbf16, #tpu.memory_space<vmem>>, %arg21: memref<1x128xf32, #tpu.memory_space<vmem>>, %arg22: memref<128x32xbf16, #tpu.memory_space<vmem>>, %arg23: memref<1x32xf32, #tpu.memory_space<vmem>>, %arg24: memref<1x32xf32, #tpu.memory_space<vmem>>, %arg25: memref<1x32xf32, #tpu.memory_space<vmem>>, %arg26: memref<1x8x32xf32, #tpu.memory_space<vmem>>) attributes {dimension_semantics = [#tpu.dimension_semantics<parallel>], iteration_bounds = array<i64: 2>, scalar_prefetch = 0 : i64, scratch_operands = 0 : i64, tpu.core_type = #tpu.core_type<tc>, window_params = [{transform_indices = @transform_0, window_bounds = array<i64: 1, 8, 32>}, {transform_indices = @transform_1, window_bounds = array<i64: 1, 8, 8>}, {transform_indices = @transform_2, window_bounds = array<i64: 1, 8, 8>}, {pipeline_mode = #tpu.pipeline_mode<synchronous>, transform_indices = @transform_3, window_bounds = array<i64: 32, 32>}, {pipeline_mode = #tpu.pipeline_mode<synchronous>, transform_indices = @transform_4, window_bounds = array<i64: 1, 32>}, {pipeline_mode = #tpu.pipeline_mode<synchronous>, transform_indices = @transform_5, window_bounds = array<i64: 32, 32>}, {pipeline_mode = #tpu.pipeline_mode<synchronous>, transform_indices = @transform_6, window_bounds = array<i64: 1, 32>}, {pipeline_mode = #tpu.pipeline_mode<synchronous>, transform_indices = @transform_7, window_bounds = array<i64: 1, 32>}, {pipeline_mode = #tpu.pipeline_mode<synchronous>, transform_indices = @transform_8, window_bounds = array<i64: 1, 32>}, {pipeline_mode = #tpu.pipeline_mode<synchronous>, transform_indices = @transform_9, window_bounds = array<i64: 32, 32>}, {pipeline_mode = #tpu.pipeline_mode<synchronous>, transform_indices = @transform_10, window_bounds = array<i64: 1, 32>}, {pipeline_mode = #tpu.pipeline_mode<synchronous>, transform_indices = @transform_11, window_bounds = array<i64: 32, 32>}, {pipeline_mode = #tpu.pipeline_mode<synchronous>, transform_indices = @transform_12, window_bounds = array<i64: 1, 32>}, {pipeline_mode = #tpu.pipeline_mode<synchronous>, transform_indices = @transform_13, window_bounds = array<i64: 32, 32>}, {pipeline_mode = #tpu.pipeline_mode<synchronous>, transform_indices = @transform_14, window_bounds = array<i64: 1, 32>}, {pipeline_mode = #tpu.pipeline_mode<synchronous>, transform_indices = @transform_15, window_bounds = array<i64: 32, 32>}, {pipeline_mode = #tpu.pipeline_mode<synchronous>, transform_indices = @transform_16, window_bounds = array<i64: 1, 32>}, {pipeline_mode = #tpu.pipeline_mode<synchronous>, transform_indices = @transform_17, window_bounds = array<i64: 1, 32>}, {pipeline_mode = #tpu.pipeline_mode<synchronous>, transform_indices = @transform_18, window_bounds = array<i64: 1, 32>}, {pipeline_mode = #tpu.pipeline_mode<synchronous>, transform_indices = @transform_19, window_bounds = array<i64: 32, 128>}, {pipeline_mode = #tpu.pipeline_mode<synchronous>, transform_indices = @transform_20, window_bounds = array<i64: 1, 128>}, {pipeline_mode = #tpu.pipeline_mode<synchronous>, transform_indices = @transform_21, window_bounds = array<i64: 128, 32>}, {pipeline_mode = #tpu.pipeline_mode<synchronous>, transform_indices = @transform_22, window_bounds = array<i64: 1, 32>}, {pipeline_mode = #tpu.pipeline_mode<synchronous>, transform_indices = @transform_23, window_bounds = array<i64: 1, 32>}, {pipeline_mode = #tpu.pipeline_mode<synchronous>, transform_indices = @transform_24, window_bounds = array<i64: 1, 32>}, {transform_indices = @transform_25, window_bounds = array<i64: 1, 8, 32>}]} {
    %c0 = arith.constant 0 : index
    %c0_0 = arith.constant 0 : index
    %c0_1 = arith.constant 0 : index
    %0 = vector.load %arg1[%c0, %c0_0, %c0_1] : memref<1x8x32xf32, #tpu.memory_space<vmem>>, vector<1x8x32xf32>
    %c0_2 = arith.constant 0 : index
    %c0_3 = arith.constant 0 : index
    %c0_4 = arith.constant 0 : index
    %1 = vector.load %arg2[%c0_2, %c0_3, %c0_4] : memref<1x8x8xbf16, #tpu.memory_space<vmem>>, vector<1x8x8xbf16>
    %2 = arith.extf %1 : vector<1x8x8xbf16> to vector<1x8x8xf32>
    %cst = arith.constant dense<0.000000e+00> : vector<1x8xf32>
    %3 = vector.multi_reduction <add>, %2, %cst [2] : vector<1x8x8xf32> to vector<1x8xf32>
    %4 = vector.shape_cast %3 : vector<1x8xf32> to vector<1x8x1xf32>
    %cst_5 = arith.constant 1.000000e+00 : f32
    %5 = vector.broadcast %cst_5 : f32 to vector<1x8x1xf32>
    %6 = arith.addf %4, %5 : vector<1x8x1xf32>
    %7 = math.rsqrt %6 : vector<1x8x1xf32>
    %8 = arith.mulf %7, %7 : vector<1x8x1xf32>
    %9 = vector.broadcast %7 : vector<1x8x1xf32> to vector<1x8x8xf32>
    %10 = arith.mulf %9, %2 : vector<1x8x8xf32>
    %11 = tpu.transpose %7, [0, 2, 1] : vector<1x8x1xf32> -> vector<1x1x8xf32>
    %12 = vector.broadcast %11 : vector<1x1x8xf32> to vector<1x8x8xf32>
    %13 = arith.mulf %10, %12 : vector<1x8x8xf32>
    %14 = arith.truncf %13 : vector<1x8x8xf32> to vector<1x8x8xbf16>
    %15 = vector.shape_cast %0 : vector<1x8x32xf32> to vector<8x32xf32>
    %16 = arith.truncf %0 : vector<1x8x32xf32> to vector<1x8x32xbf16>
    "tpu.trace_start"() <{level = 10 : i32, message = "bnm,bmd->bnd"}> : () -> ()
    %cst_6 = arith.constant dense<0.000000e+00> : vector<1x8x32xf32>
    %17 = tpu.matmul %14, %16, %cst_6 {dimension_numbers = #tpu.dot_dimension_numbers<[2], [1], [1], [2], [0, 0, 0, 1, 1, 2], [0], [0]>} : vector<1x8x8xbf16>, vector<1x8x32xbf16>, vector<1x8x32xf32> -> vector<1x8x32xf32>
    "tpu.trace_stop"() : () -> ()
    %18 = vector.broadcast %8 : vector<1x8x1xf32> to vector<1x8x32xf32>
    %19 = arith.mulf %18, %0 : vector<1x8x32xf32>
    %20 = arith.addf %17, %19 : vector<1x8x32xf32>
    %21 = vector.shape_cast %20 : vector<1x8x32xf32> to vector<8x32xf32>
    %22 = arith.truncf %21 : vector<8x32xf32> to vector<8x32xbf16>
    %c0_7 = arith.constant 0 : index
    %c0_8 = arith.constant 0 : index
    %23 = vector.load %arg4[%c0_7, %c0_8] : memref<32x32xbf16, #tpu.memory_space<vmem>>, vector<32x32xbf16>
    %cst_9 = arith.constant dense<0.000000e+00> : vector<8x32xf32>
    %24 = tpu.matmul %22, %23, %cst_9 {dimension_numbers = #tpu.dot_dimension_numbers<[1], [0], [0], [1], [0, 0, 1, 1], [], []>} : vector<8x32xbf16>, vector<32x32xbf16>, vector<8x32xf32> -> vector<8x32xf32>
    %c0_10 = arith.constant 0 : index
    %c0_11 = arith.constant 0 : index
    %25 = vector.load %arg5[%c0_10, %c0_11] : memref<1x32xf32, #tpu.memory_space<vmem>>, vector<1x32xf32>
    %26 = vector.broadcast %25 : vector<1x32xf32> to vector<8x32xf32>
    %27 = arith.addf %24, %26 : vector<8x32xf32>
    %cst_12 = arith.constant 0.000000e+00 : f32
    %28 = vector.broadcast %cst_12 : f32 to vector<8x32xf32>
    %29 = arith.maximumf %27, %28 : vector<8x32xf32>
    %30 = vector.shape_cast %29 : vector<8x32xf32> to vector<1x8x32xf32>
    %31 = arith.truncf %30 : vector<1x8x32xf32> to vector<1x8x32xbf16>
    "tpu.trace_start"() <{level = 10 : i32, message = "bnm,bmd->bnd"}> : () -> ()
    %cst_13 = arith.constant dense<0.000000e+00> : vector<1x8x32xf32>
    %32 = tpu.matmul %14, %31, %cst_13 {dimension_numbers = #tpu.dot_dimension_numbers<[2], [1], [1], [2], [0, 0, 0, 1, 1, 2], [0], [0]>} : vector<1x8x8xbf16>, vector<1x8x32xbf16>, vector<1x8x32xf32> -> vector<1x8x32xf32>
    "tpu.trace_stop"() : () -> ()
    %33 = vector.broadcast %8 : vector<1x8x1xf32> to vector<1x8x32xf32>
    %34 = arith.mulf %33, %30 : vector<1x8x32xf32>
    %35 = arith.addf %32, %34 : vector<1x8x32xf32>
    %36 = vector.shape_cast %35 : vector<1x8x32xf32> to vector<8x32xf32>
    %37 = arith.truncf %36 : vector<8x32xf32> to vector<8x32xbf16>
    %c0_14 = arith.constant 0 : index
    %c0_15 = arith.constant 0 : index
    %38 = vector.load %arg6[%c0_14, %c0_15] : memref<32x32xbf16, #tpu.memory_space<vmem>>, vector<32x32xbf16>
    %cst_16 = arith.constant dense<0.000000e+00> : vector<8x32xf32>
    %39 = tpu.matmul %37, %38, %cst_16 {dimension_numbers = #tpu.dot_dimension_numbers<[1], [0], [0], [1], [0, 0, 1, 1], [], []>} : vector<8x32xbf16>, vector<32x32xbf16>, vector<8x32xf32> -> vector<8x32xf32>
    %c0_17 = arith.constant 0 : index
    %c0_18 = arith.constant 0 : index
    %40 = vector.load %arg7[%c0_17, %c0_18] : memref<1x32xf32, #tpu.memory_space<vmem>>, vector<1x32xf32>
    %41 = vector.broadcast %40 : vector<1x32xf32> to vector<8x32xf32>
    %42 = arith.addf %39, %41 : vector<8x32xf32>
    %43 = arith.addf %15, %42 : vector<8x32xf32>
    %c0_19 = arith.constant 0 : index
    %c0_20 = arith.constant 0 : index
    %44 = vector.load %arg8[%c0_19, %c0_20] : memref<1x32xf32, #tpu.memory_space<vmem>>, vector<1x32xf32>
    %c0_21 = arith.constant 0 : index
    %c0_22 = arith.constant 0 : index
    %45 = vector.load %arg9[%c0_21, %c0_22] : memref<1x32xf32, #tpu.memory_space<vmem>>, vector<1x32xf32>
    %cst_23 = arith.constant dense<0.000000e+00> : vector<8xf32>
    %46 = vector.multi_reduction <add>, %43, %cst_23 [1] : vector<8x32xf32> to vector<8xf32>
    %47 = vector.shape_cast %46 : vector<8xf32> to vector<8x1xf32>
    %cst_24 = arith.constant 3.200000e+01 : f32
    %48 = vector.broadcast %cst_24 : f32 to vector<8x1xf32>
    %49 = arith.divf %47, %48 : vector<8x1xf32>
    %50 = vector.broadcast %49 : vector<8x1xf32> to vector<8x32xf32>
    %51 = arith.subf %43, %50 : vector<8x32xf32>
    %52 = arith.mulf %51, %51 : vector<8x32xf32>
    %cst_25 = arith.constant dense<0.000000e+00> : vector<8xf32>
    %53 = vector.multi_reduction <add>, %52, %cst_25 [1] : vector<8x32xf32> to vector<8xf32>
    %54 = vector.shape_cast %53 : vector<8xf32> to vector<8x1xf32>
    %cst_26 = arith.constant 3.200000e+01 : f32
    %55 = vector.broadcast %cst_26 : f32 to vector<8x1xf32>
    %56 = arith.divf %54, %55 : vector<8x1xf32>
    %57 = vector.broadcast %49 : vector<8x1xf32> to vector<8x32xf32>
    %58 = arith.subf %43, %57 : vector<8x32xf32>
    %cst_27 = arith.constant 9.99999974E-6 : f32
    %59 = vector.broadcast %cst_27 : f32 to vector<8x1xf32>
    %60 = arith.addf %56, %59 : vector<8x1xf32>
    %61 = math.rsqrt %60 : vector<8x1xf32>
    %62 = vector.broadcast %61 : vector<8x1xf32> to vector<8x32xf32>
    %63 = arith.mulf %58, %62 : vector<8x32xf32>
    %64 = vector.broadcast %44 : vector<1x32xf32> to vector<8x32xf32>
    %65 = arith.mulf %63, %64 : vector<8x32xf32>
    %66 = vector.broadcast %45 : vector<1x32xf32> to vector<8x32xf32>
    %67 = arith.addf %65, %66 : vector<8x32xf32>
    %68 = arith.truncf %67 : vector<8x32xf32> to vector<8x32xbf16>
    %c0_28 = arith.constant 0 : index
    %c0_29 = arith.constant 0 : index
    %69 = vector.load %arg10[%c0_28, %c0_29] : memref<32x32xbf16, #tpu.memory_space<vmem>>, vector<32x32xbf16>
    %cst_30 = arith.constant dense<0.000000e+00> : vector<8x32xf32>
    %70 = tpu.matmul %68, %69, %cst_30 {dimension_numbers = #tpu.dot_dimension_numbers<[1], [0], [0], [1], [0, 0, 1, 1], [], []>} : vector<8x32xbf16>, vector<32x32xbf16>, vector<8x32xf32> -> vector<8x32xf32>
    %c0_31 = arith.constant 0 : index
    %c0_32 = arith.constant 0 : index
    %71 = vector.load %arg11[%c0_31, %c0_32] : memref<1x32xf32, #tpu.memory_space<vmem>>, vector<1x32xf32>
    %72 = vector.broadcast %71 : vector<1x32xf32> to vector<8x32xf32>
    %73 = arith.addf %70, %72 : vector<8x32xf32>
    %c0_33 = arith.constant 0 : index
    %c0_34 = arith.constant 0 : index
    %74 = vector.load %arg12[%c0_33, %c0_34] : memref<32x32xbf16, #tpu.memory_space<vmem>>, vector<32x32xbf16>
    %cst_35 = arith.constant dense<0.000000e+00> : vector<8x32xf32>
    %75 = tpu.matmul %68, %74, %cst_35 {dimension_numbers = #tpu.dot_dimension_numbers<[1], [0], [0], [1], [0, 0, 1, 1], [], []>} : vector<8x32xbf16>, vector<32x32xbf16>, vector<8x32xf32> -> vector<8x32xf32>
    %c0_36 = arith.constant 0 : index
    %c0_37 = arith.constant 0 : index
    %76 = vector.load %arg13[%c0_36, %c0_37] : memref<1x32xf32, #tpu.memory_space<vmem>>, vector<1x32xf32>
    %77 = vector.broadcast %76 : vector<1x32xf32> to vector<8x32xf32>
    %78 = arith.addf %75, %77 : vector<8x32xf32>
    %c0_38 = arith.constant 0 : index
    %c0_39 = arith.constant 0 : index
    %79 = vector.load %arg14[%c0_38, %c0_39] : memref<32x32xbf16, #tpu.memory_space<vmem>>, vector<32x32xbf16>
    %cst_40 = arith.constant dense<0.000000e+00> : vector<8x32xf32>
    %80 = tpu.matmul %68, %79, %cst_40 {dimension_numbers = #tpu.dot_dimension_numbers<[1], [0], [0], [1], [0, 0, 1, 1], [], []>} : vector<8x32xbf16>, vector<32x32xbf16>, vector<8x32xf32> -> vector<8x32xf32>
    %c0_41 = arith.constant 0 : index
    %c0_42 = arith.constant 0 : index
    %81 = vector.load %arg15[%c0_41, %c0_42] : memref<1x32xf32, #tpu.memory_space<vmem>>, vector<1x32xf32>
    %82 = vector.broadcast %81 : vector<1x32xf32> to vector<8x32xf32>
    %83 = arith.addf %80, %82 : vector<8x32xf32>
    %84 = arith.truncf %73 : vector<8x32xf32> to vector<8x32xbf16>
    %85 = vector.shape_cast %84 : vector<8x32xbf16> to vector<1x8x32xbf16>
    %86 = vector.extract_strided_slice %85 {offsets = [0, 0, 0], sizes = [1, 8, 8], strides = [1, 1, 1]} : vector<1x8x32xbf16> to vector<1x8x8xbf16>
    %87 = vector.extract_strided_slice %85 {offsets = [0, 0, 8], sizes = [1, 8, 8], strides = [1, 1, 1]} : vector<1x8x32xbf16> to vector<1x8x8xbf16>
    %88 = vector.extract_strided_slice %85 {offsets = [0, 0, 16], sizes = [1, 8, 8], strides = [1, 1, 1]} : vector<1x8x32xbf16> to vector<1x8x8xbf16>
    %89 = vector.extract_strided_slice %85 {offsets = [0, 0, 24], sizes = [1, 8, 8], strides = [1, 1, 1]} : vector<1x8x32xbf16> to vector<1x8x8xbf16>
    %90 = vector.shape_cast %86 : vector<1x8x8xbf16> to vector<1x1x8x8xbf16>
    %91 = vector.shape_cast %87 : vector<1x8x8xbf16> to vector<1x1x8x8xbf16>
    %92 = vector.shape_cast %88 : vector<1x8x8xbf16> to vector<1x1x8x8xbf16>
    %93 = vector.shape_cast %89 : vector<1x8x8xbf16> to vector<1x1x8x8xbf16>
    %94 = tpu.concatenate %90, %91, %92, %93 in 0 : vector<1x1x8x8xbf16>, vector<1x1x8x8xbf16>, vector<1x1x8x8xbf16>, vector<1x1x8x8xbf16> -> vector<4x1x8x8xbf16>
    %95 = vector.shape_cast %94 : vector<4x1x8x8xbf16> to vector<4x8x8xbf16>
    %96 = arith.truncf %78 : vector<8x32xf32> to vector<8x32xbf16>
    %97 = vector.shape_cast %96 : vector<8x32xbf16> to vector<1x8x32xbf16>
    %98 = vector.extract_strided_slice %97 {offsets = [0, 0, 0], sizes = [1, 8, 8], strides = [1, 1, 1]} : vector<1x8x32xbf16> to vector<1x8x8xbf16>
    %99 = vector.extract_strided_slice %97 {offsets = [0, 0, 8], sizes = [1, 8, 8], strides = [1, 1, 1]} : vector<1x8x32xbf16> to vector<1x8x8xbf16>
    %100 = vector.extract_strided_slice %97 {offsets = [0, 0, 16], sizes = [1, 8, 8], strides = [1, 1, 1]} : vector<1x8x32xbf16> to vector<1x8x8xbf16>
    %101 = vector.extract_strided_slice %97 {offsets = [0, 0, 24], sizes = [1, 8, 8], strides = [1, 1, 1]} : vector<1x8x32xbf16> to vector<1x8x8xbf16>
    %102 = vector.shape_cast %98 : vector<1x8x8xbf16> to vector<1x1x8x8xbf16>
    %103 = vector.shape_cast %99 : vector<1x8x8xbf16> to vector<1x1x8x8xbf16>
    %104 = vector.shape_cast %100 : vector<1x8x8xbf16> to vector<1x1x8x8xbf16>
    %105 = vector.shape_cast %101 : vector<1x8x8xbf16> to vector<1x1x8x8xbf16>
    %106 = tpu.concatenate %102, %103, %104, %105 in 0 : vector<1x1x8x8xbf16>, vector<1x1x8x8xbf16>, vector<1x1x8x8xbf16>, vector<1x1x8x8xbf16> -> vector<4x1x8x8xbf16>
    %107 = vector.shape_cast %106 : vector<4x1x8x8xbf16> to vector<4x8x8xbf16>
    %108 = arith.truncf %83 : vector<8x32xf32> to vector<8x32xbf16>
    %109 = vector.shape_cast %108 : vector<8x32xbf16> to vector<1x8x32xbf16>
    %110 = vector.extract_strided_slice %109 {offsets = [0, 0, 0], sizes = [1, 8, 8], strides = [1, 1, 1]} : vector<1x8x32xbf16> to vector<1x8x8xbf16>
    %111 = vector.extract_strided_slice %109 {offsets = [0, 0, 8], sizes = [1, 8, 8], strides = [1, 1, 1]} : vector<1x8x32xbf16> to vector<1x8x8xbf16>
    %112 = vector.extract_strided_slice %109 {offsets = [0, 0, 16], sizes = [1, 8, 8], strides = [1, 1, 1]} : vector<1x8x32xbf16> to vector<1x8x8xbf16>
    %113 = vector.extract_strided_slice %109 {offsets = [0, 0, 24], sizes = [1, 8, 8], strides = [1, 1, 1]} : vector<1x8x32xbf16> to vector<1x8x8xbf16>
    %114 = vector.shape_cast %110 : vector<1x8x8xbf16> to vector<1x1x8x8xbf16>
    %115 = vector.shape_cast %111 : vector<1x8x8xbf16> to vector<1x1x8x8xbf16>
    %116 = vector.shape_cast %112 : vector<1x8x8xbf16> to vector<1x1x8x8xbf16>
    %117 = vector.shape_cast %113 : vector<1x8x8xbf16> to vector<1x1x8x8xbf16>
    %118 = tpu.concatenate %114, %115, %116, %117 in 0 : vector<1x1x8x8xbf16>, vector<1x1x8x8xbf16>, vector<1x1x8x8xbf16>, vector<1x1x8x8xbf16> -> vector<4x1x8x8xbf16>
    %119 = vector.shape_cast %118 : vector<4x1x8x8xbf16> to vector<4x8x8xbf16>
    %c0_43 = arith.constant 0 : index
    %c0_44 = arith.constant 0 : index
    %c0_45 = arith.constant 0 : index
    %120 = vector.load %arg3[%c0_43, %c0_44, %c0_45] : memref<1x8x8xbf16, #tpu.memory_space<vmem>>, vector<1x8x8xbf16>
    %121 = arith.extf %120 : vector<1x8x8xbf16> to vector<1x8x8xf32>
    %122 = vector.shape_cast %121 : vector<1x8x8xf32> to vector<1x1x8x8xf32>
    %123 = vector.shape_cast %122 : vector<1x1x8x8xf32> to vector<1x1x8x8xf32>
    %124 = vector.broadcast %123 : vector<1x1x8x8xf32> to vector<4x1x8x8xf32>
    %125 = vector.shape_cast %124 : vector<4x1x8x8xf32> to vector<4x8x8xf32>
    "tpu.trace_start"() <{level = 10 : i32, message = "xnd,xmd->xnm"}> : () -> ()
    %cst_46 = arith.constant dense<0.000000e+00> : vector<4x8x8xf32>
    %126 = tpu.matmul %95, %107, %cst_46 {dimension_numbers = #tpu.dot_dimension_numbers<[2], [2], [1], [1], [0, 0, 0, 1, 1, 1], [0], [0]>} : vector<4x8x8xbf16>, vector<4x8x8xbf16>, vector<4x8x8xf32> -> vector<4x8x8xf32>
    "tpu.trace_stop"() : () -> ()
    %127 = arith.addf %126, %125 : vector<4x8x8xf32>
    %cst_47 = arith.constant dense<0xFF800000> : vector<4x8xf32>
    %128 = vector.multi_reduction <maximumf>, %127, %cst_47 [2] : vector<4x8x8xf32> to vector<4x8xf32>
    %129 = vector.shape_cast %128 : vector<4x8xf32> to vector<4x8x1xf32>
    %130 = vector.broadcast %129 : vector<4x8x1xf32> to vector<4x8x8xf32>
    %131 = arith.subf %127, %130 : vector<4x8x8xf32>
    %132 = math.exp %131 : vector<4x8x8xf32>
    %cst_48 = arith.constant dense<0.000000e+00> : vector<4x8xf32>
    %133 = vector.multi_reduction <add>, %132, %cst_48 [2] : vector<4x8x8xf32> to vector<4x8xf32>
    %134 = vector.shape_cast %133 : vector<4x8xf32> to vector<4x8x1xf32>
    %135 = tpu.reciprocal %134 {approx = true} : vector<4x8x1xf32> -> vector<4x8x1xf32>
    %136 = vector.broadcast %135 : vector<4x8x1xf32> to vector<4x8x8xf32>
    %137 = arith.mulf %132, %136 : vector<4x8x8xf32>
    %138 = arith.truncf %137 : vector<4x8x8xf32> to vector<4x8x8xbf16>
    "tpu.trace_start"() <{level = 10 : i32, message = "xnm,xmd->xnd"}> : () -> ()
    %cst_49 = arith.constant dense<0.000000e+00> : vector<4x8x8xf32>
    %139 = tpu.matmul %138, %119, %cst_49 {dimension_numbers = #tpu.dot_dimension_numbers<[2], [1], [1], [2], [0, 0, 0, 1, 1, 2], [0], [0]>} : vector<4x8x8xbf16>, vector<4x8x8xbf16>, vector<4x8x8xf32> -> vector<4x8x8xf32>
    "tpu.trace_stop"() : () -> ()
    %140 = vector.extract_strided_slice %139 {offsets = [0, 0, 0], sizes = [1, 8, 8], strides = [1, 1, 1]} : vector<4x8x8xf32> to vector<1x8x8xf32>
    %141 = vector.shape_cast %140 : vector<1x8x8xf32> to vector<8x8xf32>
    %142 = vector.extract_strided_slice %139 {offsets = [1, 0, 0], sizes = [1, 8, 8], strides = [1, 1, 1]} : vector<4x8x8xf32> to vector<1x8x8xf32>
    %143 = vector.shape_cast %142 : vector<1x8x8xf32> to vector<8x8xf32>
    %144 = vector.extract_strided_slice %139 {offsets = [2, 0, 0], sizes = [1, 8, 8], strides = [1, 1, 1]} : vector<4x8x8xf32> to vector<1x8x8xf32>
    %145 = vector.shape_cast %144 : vector<1x8x8xf32> to vector<8x8xf32>
    %146 = vector.extract_strided_slice %139 {offsets = [3, 0, 0], sizes = [1, 8, 8], strides = [1, 1, 1]} : vector<4x8x8xf32> to vector<1x8x8xf32>
    %147 = vector.shape_cast %146 : vector<1x8x8xf32> to vector<8x8xf32>
    %148 = tpu.concatenate %141, %143, %145, %147 in 1 : vector<8x8xf32>, vector<8x8xf32>, vector<8x8xf32>, vector<8x8xf32> -> vector<8x32xf32>
    %149 = arith.truncf %148 : vector<8x32xf32> to vector<8x32xbf16>
    %c0_50 = arith.constant 0 : index
    %c0_51 = arith.constant 0 : index
    %150 = vector.load %arg16[%c0_50, %c0_51] : memref<32x32xbf16, #tpu.memory_space<vmem>>, vector<32x32xbf16>
    %cst_52 = arith.constant dense<0.000000e+00> : vector<8x32xf32>
    %151 = tpu.matmul %149, %150, %cst_52 {dimension_numbers = #tpu.dot_dimension_numbers<[1], [0], [0], [1], [0, 0, 1, 1], [], []>} : vector<8x32xbf16>, vector<32x32xbf16>, vector<8x32xf32> -> vector<8x32xf32>
    %c0_53 = arith.constant 0 : index
    %c0_54 = arith.constant 0 : index
    %152 = vector.load %arg17[%c0_53, %c0_54] : memref<1x32xf32, #tpu.memory_space<vmem>>, vector<1x32xf32>
    %153 = vector.broadcast %152 : vector<1x32xf32> to vector<8x32xf32>
    %154 = arith.addf %151, %153 : vector<8x32xf32>
    %155 = arith.addf %67, %154 : vector<8x32xf32>
    %c0_55 = arith.constant 0 : index
    %c0_56 = arith.constant 0 : index
    %156 = vector.load %arg18[%c0_55, %c0_56] : memref<1x32xf32, #tpu.memory_space<vmem>>, vector<1x32xf32>
    %c0_57 = arith.constant 0 : index
    %c0_58 = arith.constant 0 : index
    %157 = vector.load %arg19[%c0_57, %c0_58] : memref<1x32xf32, #tpu.memory_space<vmem>>, vector<1x32xf32>
    %cst_59 = arith.constant dense<0.000000e+00> : vector<8xf32>
    %158 = vector.multi_reduction <add>, %155, %cst_59 [1] : vector<8x32xf32> to vector<8xf32>
    %159 = vector.shape_cast %158 : vector<8xf32> to vector<8x1xf32>
    %cst_60 = arith.constant 3.200000e+01 : f32
    %160 = vector.broadcast %cst_60 : f32 to vector<8x1xf32>
    %161 = arith.divf %159, %160 : vector<8x1xf32>
    %162 = vector.broadcast %161 : vector<8x1xf32> to vector<8x32xf32>
    %163 = arith.subf %155, %162 : vector<8x32xf32>
    %164 = arith.mulf %163, %163 : vector<8x32xf32>
    %cst_61 = arith.constant dense<0.000000e+00> : vector<8xf32>
    %165 = vector.multi_reduction <add>, %164, %cst_61 [1] : vector<8x32xf32> to vector<8xf32>
    %166 = vector.shape_cast %165 : vector<8xf32> to vector<8x1xf32>
    %cst_62 = arith.constant 3.200000e+01 : f32
    %167 = vector.broadcast %cst_62 : f32 to vector<8x1xf32>
    %168 = arith.divf %166, %167 : vector<8x1xf32>
    %169 = vector.broadcast %161 : vector<8x1xf32> to vector<8x32xf32>
    %170 = arith.subf %155, %169 : vector<8x32xf32>
    %cst_63 = arith.constant 9.99999974E-6 : f32
    %171 = vector.broadcast %cst_63 : f32 to vector<8x1xf32>
    %172 = arith.addf %168, %171 : vector<8x1xf32>
    %173 = math.rsqrt %172 : vector<8x1xf32>
    %174 = vector.broadcast %173 : vector<8x1xf32> to vector<8x32xf32>
    %175 = arith.mulf %170, %174 : vector<8x32xf32>
    %176 = vector.broadcast %156 : vector<1x32xf32> to vector<8x32xf32>
    %177 = arith.mulf %175, %176 : vector<8x32xf32>
    %178 = vector.broadcast %157 : vector<1x32xf32> to vector<8x32xf32>
    %179 = arith.addf %177, %178 : vector<8x32xf32>
    %180 = arith.truncf %179 : vector<8x32xf32> to vector<8x32xbf16>
    %c0_64 = arith.constant 0 : index
    %c0_65 = arith.constant 0 : index
    %181 = vector.load %arg20[%c0_64, %c0_65] : memref<32x128xbf16, #tpu.memory_space<vmem>>, vector<32x128xbf16>
    %cst_66 = arith.constant dense<0.000000e+00> : vector<8x128xf32>
    %182 = tpu.matmul %180, %181, %cst_66 {dimension_numbers = #tpu.dot_dimension_numbers<[1], [0], [0], [1], [0, 0, 1, 1], [], []>} : vector<8x32xbf16>, vector<32x128xbf16>, vector<8x128xf32> -> vector<8x128xf32>
    %c0_67 = arith.constant 0 : index
    %c0_68 = arith.constant 0 : index
    %183 = vector.load %arg21[%c0_67, %c0_68] : memref<1x128xf32, #tpu.memory_space<vmem>>, vector<1x128xf32>
    %184 = vector.broadcast %183 : vector<1x128xf32> to vector<8x128xf32>
    %185 = arith.addf %182, %184 : vector<8x128xf32>
    %cst_69 = arith.constant 0.000000e+00 : f32
    %186 = vector.broadcast %cst_69 : f32 to vector<8x128xf32>
    %187 = arith.maximumf %185, %186 : vector<8x128xf32>
    %188 = arith.truncf %187 : vector<8x128xf32> to vector<8x128xbf16>
    %c0_70 = arith.constant 0 : index
    %c0_71 = arith.constant 0 : index
    %189 = vector.load %arg22[%c0_70, %c0_71] : memref<128x32xbf16, #tpu.memory_space<vmem>>, vector<128x32xbf16>
    %cst_72 = arith.constant dense<0.000000e+00> : vector<8x32xf32>
    %190 = tpu.matmul %188, %189, %cst_72 {dimension_numbers = #tpu.dot_dimension_numbers<[1], [0], [0], [1], [0, 0, 1, 1], [], []>} : vector<8x128xbf16>, vector<128x32xbf16>, vector<8x32xf32> -> vector<8x32xf32>
    %c0_73 = arith.constant 0 : index
    %c0_74 = arith.constant 0 : index
    %191 = vector.load %arg23[%c0_73, %c0_74] : memref<1x32xf32, #tpu.memory_space<vmem>>, vector<1x32xf32>
    %192 = vector.broadcast %191 : vector<1x32xf32> to vector<8x32xf32>
    %193 = arith.addf %190, %192 : vector<8x32xf32>
    %194 = arith.addf %179, %193 : vector<8x32xf32>
    %c0_75 = arith.constant 0 : index
    %c0_76 = arith.constant 0 : index
    %195 = vector.load %arg24[%c0_75, %c0_76] : memref<1x32xf32, #tpu.memory_space<vmem>>, vector<1x32xf32>
    %c0_77 = arith.constant 0 : index
    %c0_78 = arith.constant 0 : index
    %196 = vector.load %arg25[%c0_77, %c0_78] : memref<1x32xf32, #tpu.memory_space<vmem>>, vector<1x32xf32>
    %cst_79 = arith.constant dense<0.000000e+00> : vector<8xf32>
    %197 = vector.multi_reduction <add>, %194, %cst_79 [1] : vector<8x32xf32> to vector<8xf32>
    %198 = vector.shape_cast %197 : vector<8xf32> to vector<8x1xf32>
    %cst_80 = arith.constant 3.200000e+01 : f32
    %199 = vector.broadcast %cst_80 : f32 to vector<8x1xf32>
    %200 = arith.divf %198, %199 : vector<8x1xf32>
    %201 = vector.broadcast %200 : vector<8x1xf32> to vector<8x32xf32>
    %202 = arith.subf %194, %201 : vector<8x32xf32>
    %203 = arith.mulf %202, %202 : vector<8x32xf32>
    %cst_81 = arith.constant dense<0.000000e+00> : vector<8xf32>
    %204 = vector.multi_reduction <add>, %203, %cst_81 [1] : vector<8x32xf32> to vector<8xf32>
    %205 = vector.shape_cast %204 : vector<8xf32> to vector<8x1xf32>
    %cst_82 = arith.constant 3.200000e+01 : f32
    %206 = vector.broadcast %cst_82 : f32 to vector<8x1xf32>
    %207 = arith.divf %205, %206 : vector<8x1xf32>
    %208 = vector.broadcast %200 : vector<8x1xf32> to vector<8x32xf32>
    %209 = arith.subf %194, %208 : vector<8x32xf32>
    %cst_83 = arith.constant 9.99999974E-6 : f32
    %210 = vector.broadcast %cst_83 : f32 to vector<8x1xf32>
    %211 = arith.addf %207, %210 : vector<8x1xf32>
    %212 = math.rsqrt %211 : vector<8x1xf32>
    %213 = vector.broadcast %212 : vector<8x1xf32> to vector<8x32xf32>
    %214 = arith.mulf %209, %213 : vector<8x32xf32>
    %215 = vector.broadcast %195 : vector<1x32xf32> to vector<8x32xf32>
    %216 = arith.mulf %214, %215 : vector<8x32xf32>
    %217 = vector.broadcast %196 : vector<1x32xf32> to vector<8x32xf32>
    %218 = arith.addf %216, %217 : vector<8x32xf32>
    %219 = vector.shape_cast %218 : vector<8x32xf32> to vector<1x8x32xf32>
    %c0_84 = arith.constant 0 : index
    %c0_85 = arith.constant 0 : index
    %c0_86 = arith.constant 0 : index
    %220 = vector.load %arg26[%c0_84, %c0_85, %c0_86] : memref<1x8x32xf32, #tpu.memory_space<vmem>>, vector<1x8x32xf32>
    tpu.vector_store %arg26[%c0_84, %c0_85, %c0_86], %219 {strides = array<i32>} : memref<1x8x32xf32, #tpu.memory_space<vmem>>, vector<1x8x32xf32>,
    return
  }
  func.func @transform_0(%arg0: i32) -> (i32, i32, i32) {
    %c0_i32 = arith.constant 0 : i32
    %c0_i32_0 = arith.constant 0 : i32
    %c0_i32_1 = arith.constant 0 : i32
    return %arg0, %c0_i32, %c0_i32_0 : i32, i32, i32
  }
  func.func @transform_1(%arg0: i32) -> (i32, i32, i32) {
    %c0_i32 = arith.constant 0 : i32
    %c0_i32_0 = arith.constant 0 : i32
    %c0_i32_1 = arith.constant 0 : i32
    return %arg0, %c0_i32, %c0_i32_0 : i32, i32, i32
  }
  func.func @transform_2(%arg0: i32) -> (i32, i32, i32) {
    %c0_i32 = arith.constant 0 : i32
    %c0_i32_0 = arith.constant 0 : i32
    %c0_i32_1 = arith.constant 0 : i32
    return %arg0, %c0_i32, %c0_i32_0 : i32, i32, i32
  }
  func.func @transform_3(%arg0: i32) -> (i32, i32) {
    %c0_i32 = arith.constant 0 : i32
    %c0_i32_0 = arith.constant 0 : i32
    %c0_i32_1 = arith.constant 0 : i32
    return %c0_i32, %c0_i32_0 : i32, i32
  }
  func.func @transform_4(%arg0: i32) -> (i32, i32) {
    %c0_i32 = arith.constant 0 : i32
    %c0_i32_0 = arith.constant 0 : i32
    %c0_i32_1 = arith.constant 0 : i32
    return %c0_i32, %c0_i32_0 : i32, i32
  }
  func.func @transform_5(%arg0: i32) -> (i32, i32) {
    %c0_i32 = arith.constant 0 : i32
    %c0_i32_0 = arith.constant 0 : i32
    %c0_i32_1 = arith.constant 0 : i32
    return %c0_i32, %c0_i32_0 : i32, i32
  }
  func.func @transform_6(%arg0: i32) -> (i32, i32) {
    %c0_i32 = arith.constant 0 : i32
    %c0_i32_0 = arith.constant 0 : i32
    %c0_i32_1 = arith.constant 0 : i32
    return %c0_i32, %c0_i32_0 : i32, i32
  }
  func.func @transform_7(%arg0: i32) -> (i32, i32) {
    %c0_i32 = arith.constant 0 : i32
    %c0_i32_0 = arith.constant 0 : i32
    %c0_i32_1 = arith.constant 0 : i32
    return %c0_i32, %c0_i32_0 : i32, i32
  }
  func.func @transform_8(%arg0: i32) -> (i32, i32) {
    %c0_i32 = arith.constant 0 : i32
    %c0_i32_0 = arith.constant 0 : i32
    %c0_i32_1 = arith.constant 0 : i32
    return %c0_i32, %c0_i32_0 : i32, i32
  }
  func.func @transform_9(%arg0: i32) -> (i32, i32) {
    %c0_i32 = arith.constant 0 : i32
    %c0_i32_0 = arith.constant 0 : i32
    %c0_i32_1 = arith.constant 0 : i32
    return %c0_i32, %c0_i32_0 : i32, i32
  }
  func.func @transform_10(%arg0: i32) -> (i32, i32) {
    %c0_i32 = arith.constant 0 : i32
    %c0_i32_0 = arith.constant 0 : i32
    %c0_i32_1 = arith.constant 0 : i32
    return %c0_i32, %c0_i32_0 : i32, i32
  }
  func.func @transform_11(%arg0: i32) -> (i32, i32) {
    %c0_i32 = arith.constant 0 : i32
    %c0_i32_0 = arith.constant 0 : i32
    %c0_i32_1 = arith.constant 0 : i32
    return %c0_i32, %c0_i32_0 : i32, i32
  }
  func.func @transform_12(%arg0: i32) -> (i32, i32) {
    %c0_i32 = arith.constant 0 : i32
    %c0_i32_0 = arith.constant 0 : i32
    %c0_i32_1 = arith.constant 0 : i32
    return %c0_i32, %c0_i32_0 : i32, i32
  }
  func.func @transform_13(%arg0: i32) -> (i32, i32) {
    %c0_i32 = arith.constant 0 : i32
    %c0_i32_0 = arith.constant 0 : i32
    %c0_i32_1 = arith.constant 0 : i32
    return %c0_i32, %c0_i32_0 : i32, i32
  }
  func.func @transform_14(%arg0: i32) -> (i32, i32) {
    %c0_i32 = arith.constant 0 : i32
    %c0_i32_0 = arith.constant 0 : i32
    %c0_i32_1 = arith.constant 0 : i32
    return %c0_i32, %c0_i32_0 : i32, i32
  }
  func.func @transform_15(%arg0: i32) -> (i32, i32) {
    %c0_i32 = arith.constant 0 : i32
    %c0_i32_0 = arith.constant 0 : i32
    %c0_i32_1 = arith.constant 0 : i32
    return %c0_i32, %c0_i32_0 : i32, i32
  }
  func.func @transform_16(%arg0: i32) -> (i32, i32) {
    %c0_i32 = arith.constant 0 : i32
    %c0_i32_0 = arith.constant 0 : i32
    %c0_i32_1 = arith.constant 0 : i32
    return %c0_i32, %c0_i32_0 : i32, i32
  }
  func.func @transform_17(%arg0: i32) -> (i32, i32) {
    %c0_i32 = arith.constant 0 : i32
    %c0_i32_0 = arith.constant 0 : i32
    %c0_i32_1 = arith.constant 0 : i32
    return %c0_i32, %c0_i32_0 : i32, i32
  }
  func.func @transform_18(%arg0: i32) -> (i32, i32) {
    %c0_i32 = arith.constant 0 : i32
    %c0_i32_0 = arith.constant 0 : i32
    %c0_i32_1 = arith.constant 0 : i32
    return %c0_i32, %c0_i32_0 : i32, i32
  }
  func.func @transform_19(%arg0: i32) -> (i32, i32) {
    %c0_i32 = arith.constant 0 : i32
    %c0_i32_0 = arith.constant 0 : i32
    %c0_i32_1 = arith.constant 0 : i32
    return %c0_i32, %c0_i32_0 : i32, i32
  }
  func.func @transform_20(%arg0: i32) -> (i32, i32) {
    %c0_i32 = arith.constant 0 : i32
    %c0_i32_0 = arith.constant 0 : i32
    %c0_i32_1 = arith.constant 0 : i32
    return %c0_i32, %c0_i32_0 : i32, i32
  }
  func.func @transform_21(%arg0: i32) -> (i32, i32) {
    %c0_i32 = arith.constant 0 : i32
    %c0_i32_0 = arith.constant 0 : i32
    %c0_i32_1 = arith.constant 0 : i32
    return %c0_i32, %c0_i32_0 : i32, i32
  }
  func.func @transform_22(%arg0: i32) -> (i32, i32) {
    %c0_i32 = arith.constant 0 : i32
    %c0_i32_0 = arith.constant 0 : i32
    %c0_i32_1 = arith.constant 0 : i32
    return %c0_i32, %c0_i32_0 : i32, i32
  }
  func.func @transform_23(%arg0: i32) -> (i32, i32) {
    %c0_i32 = arith.constant 0 : i32
    %c0_i32_0 = arith.constant 0 : i32
    %c0_i32_1 = arith.constant 0 : i32
    return %c0_i32, %c0_i32_0 : i32, i32
  }
  func.func @transform_24(%arg0: i32) -> (i32, i32) {
    %c0_i32 = arith.constant 0 : i32
    %c0_i32_0 = arith.constant 0 : i32
    %c0_i32_1 = arith.constant 0 : i32
    return %c0_i32, %c0_i32_0 : i32, i32
  }
  func.func @transform_25(%arg0: i32) -> (i32, i32, i32) {
    %c0_i32 = arith.constant 0 : i32
    %c0_i32_0 = arith.constant 0 : i32
    %c0_i32_1 = arith.constant 0 : i32
    return %arg0, %c0_i32, %c0_i32_0 : i32, i32, i32
  }
}

</mosaic_0001>

<llo_original>
// kernel: tpu_custom_call.1
$region0: #{tpu_custom_call.1}
  #allocation0 [shape = 'u32[]', space=smem, size = 0x4, offset = 0x4, fixed_abs, tag = 'smem constant byte address 0x4 - core index']
  #allocation1 [shape = 'u32[144,128]{1,0:T(1,128)}', space=vmem, size = 0x12000, scoped, tag = 'internal scratch']
  %s0 = inlined_call_operand.vmem [shape: f32[2,8,32], index: 0, kind: input, shape index: {}]
  %s1 = inlined_call_operand.hbm [shape: bf16[2,8,8], index: 1, kind: input, shape index: {}]
  %s2 = inlined_call_operand.hbm [shape: bf16[2,8,8], index: 2, kind: input, shape index: {}]
  %s3 = inlined_call_operand.vmem [shape: bf16[32,32], index: 3, kind: input, shape index: {}]
  %s4 = inlined_call_operand.hbm [shape: f32[1,32], index: 4, kind: input, shape index: {}]
  %s5 = inlined_call_operand.vmem [shape: bf16[32,32], index: 5, kind: input, shape index: {}]
  %s6 = inlined_call_operand.hbm [shape: f32[1,32], index: 6, kind: input, shape index: {}]
  %s7 = inlined_call_operand.hbm [shape: f32[1,32], index: 7, kind: input, shape index: {}]
  %s8 = inlined_call_operand.hbm [shape: f32[1,32], index: 8, kind: input, shape index: {}]
  %s9 = inlined_call_operand.vmem [shape: bf16[32,32], index: 9, kind: input, shape index: {}]
  %s10 = inlined_call_operand.hbm [shape: f32[1,32], index: 10, kind: input, shape index: {}]
  %s11 = inlined_call_operand.vmem [shape: bf16[32,32], index: 11, kind: input, shape index: {}]
  %s12 = inlined_call_operand.hbm [shape: f32[1,32], index: 12, kind: input, shape index: {}]
  %s13 = inlined_call_operand.vmem [shape: bf16[32,32], index: 13, kind: input, shape index: {}]
  %s14 = inlined_call_operand.hbm [shape: f32[1,32], index: 14, kind: input, shape index: {}]
  %s15 = inlined_call_operand.vmem [shape: bf16[32,32], index: 15, kind: input, shape index: {}]
  %s16 = inlined_call_operand.hbm [shape: f32[1,32], index: 16, kind: input, shape index: {}]
  %s17 = inlined_call_operand.hbm [shape: f32[1,32], index: 17, kind: input, shape index: {}]
  %s18 = inlined_call_operand.vmem [shape: f32[1,32], index: 18, kind: input, shape index: {}]
  %s19 = inlined_call_operand.vmem [shape: bf16[32,128], index: 19, kind: input, shape index: {}]
  %s20 = inlined_call_operand.vmem [shape: f32[1,128], index: 20, kind: input, shape index: {}]
  %s21 = inlined_call_operand.vmem [shape: bf16[128,32], index: 21, kind: input, shape index: {}]
  %s22 = inlined_call_operand.vmem [shape: f32[1,32], index: 22, kind: input, shape index: {}]
  %s23 = inlined_call_operand.vmem [shape: f32[1,32], index: 23, kind: input, shape index: {}]
  %s24 = inlined_call_operand.vmem [shape: f32[1,32], index: 24, kind: input, shape index: {}]
  %s25 = inlined_call_operand.hbm [shape: f32[2,8,32], index: 25, kind: output, shape index: {}]
  %s26 = sld [smem:[#allocation0]]
  $region177: #{tpu_custom_call.1} parent=0
    _
  %s28 = ssub.s32 1, %s26
  %s29 = scalar_select 0, %s28, %s26
  $region1: #{tpu_custom_call.1} parent=0
    #allocation2 [shape = 'u8[4096]{0}', space=vmem, size = 0x1000, scoped, tag = 'input window, operand 1']
    #allocation3 [shape = 's32[2]{0}', space=sflag, size = 0x8, scoped, tag = 'scoped memory for tpu_custom_call.1']
    #allocation4 [shape = 's32[2]{0}', space=sflag, size = 0x8, scoped, tag = 'scoped memory for tpu_custom_call.1']
    #allocation5 [shape = 'u8[4096]{0}', space=vmem, size = 0x1000, scoped, tag = 'input window, operand 2']
    #allocation6 [shape = 's32[2]{0}', space=sflag, size = 0x8, scoped, tag = 'scoped memory for tpu_custom_call.1']
    #allocation7 [shape = 'u8[512]{0}', space=vmem, size = 0x400, scoped, tag = 'input window, operand 4, single buffered']
    #allocation8 [shape = 'u8[512]{0}', space=vmem, size = 0x400, scoped, tag = 'input window, operand 6, single buffered']
    #allocation9 [shape = 's32[1]{0}', space=sflag, size = 0x4, scoped, tag = 'scoped memory for tpu_custom_call.1']
    #allocation10 [shape = 'u8[512]{0}', space=vmem, size = 0x400, scoped, tag = 'input window, operand 7, single buffered']
    #allocation11 [shape = 'u8[512]{0}', space=vmem, size = 0x400, scoped, tag = 'input window, operand 8, single buffered']
    #allocation12 [shape = 's32[1]{0}', space=sflag, size = 0x4, scoped, tag = 'scoped memory for tpu_custom_call.1']
    #allocation13 [shape = 'u8[512]{0}', space=vmem, size = 0x400, scoped, tag = 'input window, operand 10, single buffered']
    #allocation14 [shape = 'u8[512]{0}', space=vmem, size = 0x400, scoped, tag = 'input window, operand 12, single buffered']
    #allocation15 [shape = 's32[1]{0}', space=sflag, size = 0x4, scoped, tag = 'scoped memory for tpu_custom_call.1']
    #allocation16 [shape = 'u8[512]{0}', space=vmem, size = 0x400, scoped, tag = 'input window, operand 14, single buffered']
    #allocation17 [shape = 'u8[512]{0}', space=vmem, size = 0x400, scoped, tag = 'input window, operand 16, single buffered']
    #allocation18 [shape = 's32[1]{0}', space=sflag, size = 0x4, scoped, tag = 'scoped memory for tpu_custom_call.1']
    #allocation19 [shape = 'u8[512]{0}', space=vmem, size = 0x400, scoped, tag = 'input window, operand 17, single buffered']
    #allocation20 [shape = 'u8[8192]{0}', space=vmem, size = 0x2000, scoped, tag = 'output window, operand 0']
    %30 = vsyncpa [#allocation3], 0
    %s31 = scalar_lea.sflag [#allocation3], 1
    %32 = vsyncpa %s31, 0
    %33 = vsyncpa [#allocation6], 0
    %s34 = scalar_lea.sflag [#allocation6], 1
    %35 = vsyncpa %s34, 0
    %36 = vsyncpa [#allocation9], 0
    %37 = vsyncpa [#allocation12], 0
    %38 = vsyncpa [#allocation15], 0
    %39 = vsyncpa [#allocation18], 0
    %40 = vsyncpa [#allocation4], 0
    %s41 = scalar_lea.sflag [#allocation4], 1
    %42 = vsyncpa %s41, 0
    loop: start=0, step=1, limit=4
    $region2: #{tpu_custom_call.1} parent=1 // loop_pre_header
      _
    $region3: #{tpu_custom_call.1} parent=1 // loop_header
      %s44 = sphi 0, %s48
      %p45 = scmp.ge.s32.totalorder %s44, 4
      %s54 = sphi 0, %s56
      %s57 = sphi 0, %s54
      %s58 = sphi 0, %s57
      %s74 = sphi 0, %s58
      %s80 = sphi 0, %s82
      %s83 = sphi 0, %s80
      %s84 = sphi 0, %s83
      %s100 = sphi 0, %s84
      %s106 = sphi 0, %s108
      %s109 = sphi 0, %s106
      %s110 = sphi 0, %s109
      %s126 = sphi 0, %s110
      %s130 = sphi 0, %s130
      %s132 = sphi 0, %s130
      %s133 = sphi 0, %s132
      %s147 = sphi 0, %s133
      %s151 = sphi 0, %s151
      %s153 = sphi 0, %s151
      %s154 = sphi 0, %s153
      %s168 = sphi 0, %s154
      %s172 = sphi 0, %s172
      %s174 = sphi 0, %s172
      %s175 = sphi 0, %s174
      %s189 = sphi 0, %s175
      %s193 = sphi 0, %s193
      %s195 = sphi 0, %s193
      %s196 = sphi 0, %s195
      %s210 = sphi 0, %s196
      %s214 = sphi 0, %s214
      %s216 = sphi 0, %s214
      %s217 = sphi 0, %s216
      %s231 = sphi 0, %s217
      %s235 = sphi 0, %s235
      %s237 = sphi 0, %s235
      %s238 = sphi 0, %s237
      %s252 = sphi 0, %s238
      %s256 = sphi 0, %s256
      %s258 = sphi 0, %s256
      %s259 = sphi 0, %s258
      %s273 = sphi 0, %s259
      %s277 = sphi 0, %s277
      %s279 = sphi 0, %s277
      %s280 = sphi 0, %s279
      %s294 = sphi 0, %s280
      %s298 = sphi 0, %s298
      %s300 = sphi 0, %s298
      %s301 = sphi 0, %s300
      %s315 = sphi 0, %s301
      %s319 = sphi 0, %s319
      %s321 = sphi 0, %s319
      %s322 = sphi 0, %s321
      %s336 = sphi 0, %s322
      %s340 = sphi 0, %s340
      %s342 = sphi 0, %s340
      %s343 = sphi 0, %s342
      %s357 = sphi 0, %s343
      %s361 = sphi 0, %s361
      %s363 = sphi 0, %s361
      %s364 = sphi 0, %s363
      %s378 = sphi 0, %s364
      %s382 = sphi 0, %s382
      %s384 = sphi 0, %s382
      %s385 = sphi 0, %s384
      %s399 = sphi 0, %s385
      %s403 = sphi 0, %s403
      %s405 = sphi 0, %s403
      %s406 = sphi 0, %s405
      %s420 = sphi 0, %s406
      %s424 = sphi 0, %s424
      %s426 = sphi 0, %s424
      %s427 = sphi 0, %s426
      %s441 = sphi 0, %s427
      %s445 = sphi 0, %s445
      %s447 = sphi 0, %s445
      %s448 = sphi 0, %s447
      %s462 = sphi 0, %s448
      %s466 = sphi 0, %s466
      %s468 = sphi 0, %s466
      %s469 = sphi 0, %s468
      %s483 = sphi 0, %s469
      %s487 = sphi 0, %s487
      %s489 = sphi 0, %s487
      %s490 = sphi 0, %s489
      %s504 = sphi 0, %s490
      %s508 = sphi 0, %s508
      %s510 = sphi 0, %s508
      %s511 = sphi 0, %s510
      %s525 = sphi 0, %s511
      %s529 = sphi 0, %s529
      %s531 = sphi 0, %s529
      %s532 = sphi 0, %s531
      %s546 = sphi 0, %s532
      %s550 = sphi 0, %s550
      %s552 = sphi 0, %s550
      %s553 = sphi 0, %s552
      %s567 = sphi 0, %s553
      %s571 = sphi 0, %s571
      %s573 = sphi 0, %s571
      %s574 = sphi 0, %s573
      %s588 = sphi 0, %s574
      %s594 = sphi 0, %s596
      %s597 = sphi 0, %s594
      %s598 = sphi 0, %s597
      %s614 = sphi 0, %s598
    $region4: #{tpu_custom_call.1} parent=1 // loop_header_branch
      %47 = sbr.rel (%p45) target = $region8
    $region5: #{tpu_custom_call.1} parent=1 // loop_body
      %s49 = ssub.s32 %s44, 1
      %s50 = ssub.s32 %s44, 2
      %s51 = sadd.s32 %s44, 1
      %s52 = ssub.s32 %s44, %s51
      %p53 = scmp.eq.s32.totalorder %s52, 0
      %s55 = sadd.s32 %s54, 1
      %s56 = scalar_select %p53, %s54, %s55
      %p59 = pneg %p53
      %p60 = scmp.eq.s32.totalorder %s44, 1
      %p61 = por %p59, %p60
      %p62 = scmp.ne.s32.totalorder %s54, %s57
      %p63 = scmp.eq.s32.totalorder %s44, 0
      %p64 = por %p62, %p63
      %p65 = scmp.ne.s32.totalorder %s54, %s57
      %p66 = scmp.eq.s32.totalorder %s49, 1
      %p67 = por %p65, %p66
      %p68 = scmp.ne.s32.totalorder %s57, %s58
      %p69 = scmp.eq.s32.totalorder %s49, 0
      %p70 = por %p68, %p69
      %p71 = scmp.ne.s32.totalorder %s57, %s58
      %p72 = scmp.eq.s32.totalorder %s50, 1
      %p73 = por %p71, %p72
      %p75 = scmp.ne.s32.totalorder %s58, %s74
      %p76 = scmp.eq.s32.totalorder %s50, 0
      %p77 = por %p75, %p76
      %s78 = ssub.s32 %s44, %s51
      %p79 = scmp.eq.s32.totalorder %s78, 0
      %s81 = sadd.s32 %s80, 1
      %s82 = scalar_select %p79, %s80, %s81
      %p85 = pneg %p79
      %p86 = scmp.eq.s32.totalorder %s44, 1
      %p87 = por %p85, %p86
      %p88 = scmp.ne.s32.totalorder %s80, %s83
      %p89 = scmp.eq.s32.totalorder %s44, 0
      %p90 = por %p88, %p89
      %p91 = scmp.ne.s32.totalorder %s80, %s83
      %p92 = scmp.eq.s32.totalorder %s49, 1
      %p93 = por %p91, %p92
      %p94 = scmp.ne.s32.totalorder %s83, %s84
      %p95 = scmp.eq.s32.totalorder %s49, 0
      %p96 = por %p94, %p95
      %p97 = scmp.ne.s32.totalorder %s83, %s84
      %p98 = scmp.eq.s32.totalorder %s50, 1
      %p99 = por %p97, %p98
      %p101 = scmp.ne.s32.totalorder %s84, %s100
      %p102 = scmp.eq.s32.totalorder %s50, 0
      %p103 = por %p101, %p102
      %s104 = ssub.s32 %s44, %s51
      %p105 = scmp.eq.s32.totalorder %s104, 0
      %s107 = sadd.s32 %s106, 1
      %s108 = scalar_select %p105, %s106, %s107
      %p111 = pneg %p105
      %p112 = scmp.eq.s32.totalorder %s44, 1
      %p113 = por %p111, %p112
      %p114 = scmp.ne.s32.totalorder %s106, %s109
      %p115 = scmp.eq.s32.totalorder %s44, 0
      %p116 = por %p114, %p115
      %p117 = scmp.ne.s32.totalorder %s106, %s109
      %p118 = scmp.eq.s32.totalorder %s49, 1
      %p119 = por %p117, %p118
      %p120 = scmp.ne.s32.totalorder %s109, %s110
      %p121 = scmp.eq.s32.totalorder %s49, 0
      %p122 = por %p120, %p121
      %p123 = scmp.ne.s32.totalorder %s109, %s110
      %p124 = scmp.eq.s32.totalorder %s50, 1
      %p125 = por %p123, %p124
      %p127 = scmp.ne.s32.totalorder %s110, %s126
      %p128 = scmp.eq.s32.totalorder %s50, 0
      %p129 = por %p127, %p128
      %s131 = sadd.s32 %s130, 1
      %p134 = scmp.eq.s32.totalorder %s44, 1
      %p135 = scmp.ne.s32.totalorder %s130, %s132
      %p136 = scmp.eq.s32.totalorder %s44, 0
      %p137 = por %p135, %p136
      %p138 = scmp.ne.s32.totalorder %s130, %s132
      %p139 = scmp.eq.s32.totalorder %s49, 1
      %p140 = por %p138, %p139
      %p141 = scmp.ne.s32.totalorder %s132, %s133
      %p142 = scmp.eq.s32.totalorder %s49, 0
      %p143 = por %p141, %p142
      %p144 = scmp.ne.s32.totalorder %s132, %s133
      %p145 = scmp.eq.s32.totalorder %s50, 1
      %p146 = por %p144, %p145
      %p148 = scmp.ne.s32.totalorder %s133, %s147
      %p149 = scmp.eq.s32.totalorder %s50, 0
      %p150 = por %p148, %p149
      %s152 = sadd.s32 %s151, 1
      %p155 = scmp.eq.s32.totalorder %s44, 1
      %p156 = scmp.ne.s32.totalorder %s151, %s153
      %p157 = scmp.eq.s32.totalorder %s44, 0
      %p158 = por %p156, %p157
      %p159 = scmp.ne.s32.totalorder %s151, %s153
      %p160 = scmp.eq.s32.totalorder %s49, 1
      %p161 = por %p159, %p160
      %p162 = scmp.ne.s32.totalorder %s153, %s154
      %p163 = scmp.eq.s32.totalorder %s49, 0
      %p164 = por %p162, %p163
      %p165 = scmp.ne.s32.totalorder %s153, %s154
      %p166 = scmp.eq.s32.totalorder %s50, 1
      %p167 = por %p165, %p166
      %p169 = scmp.ne.s32.totalorder %s154, %s168
      %p170 = scmp.eq.s32.totalorder %s50, 0
      %p171 = por %p169, %p170
      %s173 = sadd.s32 %s172, 1
      %p176 = scmp.eq.s32.totalorder %s44, 1
      %p177 = scmp.ne.s32.totalorder %s172, %s174
      %p178 = scmp.eq.s32.totalorder %s44, 0
      %p179 = por %p177, %p178
      %p180 = scmp.ne.s32.totalorder %s172, %s174
      %p181 = scmp.eq.s32.totalorder %s49, 1
      %p182 = por %p180, %p181
      %p183 = scmp.ne.s32.totalorder %s174, %s175
      %p184 = scmp.eq.s32.totalorder %s49, 0
      %p185 = por %p183, %p184
      %p186 = scmp.ne.s32.totalorder %s174, %s175
      %p187 = scmp.eq.s32.totalorder %s50, 1
      %p188 = por %p186, %p187
      %p190 = scmp.ne.s32.totalorder %s175, %s189
      %p191 = scmp.eq.s32.totalorder %s50, 0
      %p192 = por %p190, %p191
      %s194 = sadd.s32 %s193, 1
      %p197 = scmp.eq.s32.totalorder %s44, 1
      %p198 = scmp.ne.s32.totalorder %s193, %s195
      %p199 = scmp.eq.s32.totalorder %s44, 0
      %p200 = por %p198, %p199
      %p201 = scmp.ne.s32.totalorder %s193, %s195
      %p202 = scmp.eq.s32.totalorder %s49, 1
      %p203 = por %p201, %p202
      %p204 = scmp.ne.s32.totalorder %s195, %s196
      %p205 = scmp.eq.s32.totalorder %s49, 0
      %p206 = por %p204, %p205
      %p207 = scmp.ne.s32.totalorder %s195, %s196
      %p208 = scmp.eq.s32.totalorder %s50, 1
      %p209 = por %p207, %p208
      %p211 = scmp.ne.s32.totalorder %s196, %s210
      %p212 = scmp.eq.s32.totalorder %s50, 0
      %p213 = por %p211, %p212
      %s215 = sadd.s32 %s214, 1
      %p218 = scmp.eq.s32.totalorder %s44, 1
      %p219 = scmp.ne.s32.totalorder %s214, %s216
      %p220 = scmp.eq.s32.totalorder %s44, 0
      %p221 = por %p219, %p220
      %p222 = scmp.ne.s32.totalorder %s214, %s216
      %p223 = scmp.eq.s32.totalorder %s49, 1
      %p224 = por %p222, %p223
      %p225 = scmp.ne.s32.totalorder %s216, %s217
      %p226 = scmp.eq.s32.totalorder %s49, 0
      %p227 = por %p225, %p226
      %p228 = scmp.ne.s32.totalorder %s216, %s217
      %p229 = scmp.eq.s32.totalorder %s50, 1
      %p230 = por %p228, %p229
      %p232 = scmp.ne.s32.totalorder %s217, %s231
      %p233 = scmp.eq.s32.totalorder %s50, 0
      %p234 = por %p232, %p233
      %s236 = sadd.s32 %s235, 1
      %p239 = scmp.eq.s32.totalorder %s44, 1
      %p240 = scmp.ne.s32.totalorder %s235, %s237
      %p241 = scmp.eq.s32.totalorder %s44, 0
      %p242 = por %p240, %p241
      %p243 = scmp.ne.s32.totalorder %s235, %s237
      %p244 = scmp.eq.s32.totalorder %s49, 1
      %p245 = por %p243, %p244
      %p246 = scmp.ne.s32.totalorder %s237, %s238
      %p247 = scmp.eq.s32.totalorder %s49, 0
      %p248 = por %p246, %p247
      %p249 = scmp.ne.s32.totalorder %s237, %s238
      %p250 = scmp.eq.s32.totalorder %s50, 1
      %p251 = por %p249, %p250
      %p253 = scmp.ne.s32.totalorder %s238, %s252
      %p254 = scmp.eq.s32.totalorder %s50, 0
      %p255 = por %p253, %p254
      %s257 = sadd.s32 %s256, 1
      %p260 = scmp.eq.s32.totalorder %s44, 1
      %p261 = scmp.ne.s32.totalorder %s256, %s258
      %p262 = scmp.eq.s32.totalorder %s44, 0
      %p263 = por %p261, %p262
      %p264 = scmp.ne.s32.totalorder %s256, %s258
      %p265 = scmp.eq.s32.totalorder %s49, 1
      %p266 = por %p264, %p265
      %p267 = scmp.ne.s32.totalorder %s258, %s259
      %p268 = scmp.eq.s32.totalorder %s49, 0
      %p269 = por %p267, %p268
      %p270 = scmp.ne.s32.totalorder %s258, %s259
      %p271 = scmp.eq.s32.totalorder %s50, 1
      %p272 = por %p270, %p271
      %p274 = scmp.ne.s32.totalorder %s259, %s273
      %p275 = scmp.eq.s32.totalorder %s50, 0
      %p276 = por %p274, %p275
      %s278 = sadd.s32 %s277, 1
      %p281 = scmp.eq.s32.totalorder %s44, 1
      %p282 = scmp.ne.s32.totalorder %s277, %s279
      %p283 = scmp.eq.s32.totalorder %s44, 0
      %p284 = por %p282, %p283
      %p285 = scmp.ne.s32.totalorder %s277, %s279
      %p286 = scmp.eq.s32.totalorder %s49, 1
      %p287 = por %p285, %p286
      %p288 = scmp.ne.s32.totalorder %s279, %s280
      %p289 = scmp.eq.s32.totalorder %s49, 0
      %p290 = por %p288, %p289
      %p291 = scmp.ne.s32.totalorder %s279, %s280
      %p292 = scmp.eq.s32.totalorder %s50, 1
      %p293 = por %p291, %p292
      %p295 = scmp.ne.s32.totalorder %s280, %s294
      %p296 = scmp.eq.s32.totalorder %s50, 0
      %p297 = por %p295, %p296
      %s299 = sadd.s32 %s298, 1
      %p302 = scmp.eq.s32.totalorder %s44, 1
      %p303 = scmp.ne.s32.totalorder %s298, %s300
      %p304 = scmp.eq.s32.totalorder %s44, 0
      %p305 = por %p303, %p304
      %p306 = scmp.ne.s32.totalorder %s298, %s300
      %p307 = scmp.eq.s32.totalorder %s49, 1
      %p308 = por %p306, %p307
      %p309 = scmp.ne.s32.totalorder %s300, %s301
      %p310 = scmp.eq.s32.totalorder %s49, 0
      %p311 = por %p309, %p310
      %p312 = scmp.ne.s32.totalorder %s300, %s301
      %p313 = scmp.eq.s32.totalorder %s50, 1
      %p314 = por %p312, %p313
      %p316 = scmp.ne.s32.totalorder %s301, %s315
      %p317 = scmp.eq.s32.totalorder %s50, 0
      %p318 = por %p316, %p317
      %s320 = sadd.s32 %s319, 1
      %p323 = scmp.eq.s32.totalorder %s44, 1
      %p324 = scmp.ne.s32.totalorder %s319, %s321
      %p325 = scmp.eq.s32.totalorder %s44, 0
      %p326 = por %p324, %p325
      %p327 = scmp.ne.s32.totalorder %s319, %s321
      %p328 = scmp.eq.s32.totalorder %s49, 1
      %p329 = por %p327, %p328
      %p330 = scmp.ne.s32.totalorder %s321, %s322
      %p331 = scmp.eq.s32.totalorder %s49, 0
      %p332 = por %p330, %p331
      %p333 = scmp.ne.s32.totalorder %s321, %s322
      %p334 = scmp.eq.s32.totalorder %s50, 1
      %p335 = por %p333, %p334
      %p337 = scmp.ne.s32.totalorder %s322, %s336
      %p338 = scmp.eq.s32.totalorder %s50, 0
      %p339 = por %p337, %p338
      %s341 = sadd.s32 %s340, 1
      %p344 = scmp.eq.s32.totalorder %s44, 1
      %p345 = scmp.ne.s32.totalorder %s340, %s342
      %p346 = scmp.eq.s32.totalorder %s44, 0
      %p347 = por %p345, %p346
      %p348 = scmp.ne.s32.totalorder %s340, %s342
      %p349 = scmp.eq.s32.totalorder %s49, 1
      %p350 = por %p348, %p349
      %p351 = scmp.ne.s32.totalorder %s342, %s343
      %p352 = scmp.eq.s32.totalorder %s49, 0
      %p353 = por %p351, %p352
      %p354 = scmp.ne.s32.totalorder %s342, %s343
      %p355 = scmp.eq.s32.totalorder %s50, 1
      %p356 = por %p354, %p355
      %p358 = scmp.ne.s32.totalorder %s343, %s357
      %p359 = scmp.eq.s32.totalorder %s50, 0
      %p360 = por %p358, %p359
      %s362 = sadd.s32 %s361, 1
      %p365 = scmp.eq.s32.totalorder %s44, 1
      %p366 = scmp.ne.s32.totalorder %s361, %s363
      %p367 = scmp.eq.s32.totalorder %s44, 0
      %p368 = por %p366, %p367
      %p369 = scmp.ne.s32.totalorder %s361, %s363
      %p370 = scmp.eq.s32.totalorder %s49, 1
      %p371 = por %p369, %p370
      %p372 = scmp.ne.s32.totalorder %s363, %s364
      %p373 = scmp.eq.s32.totalorder %s49, 0
      %p374 = por %p372, %p373
      %p375 = scmp.ne.s32.totalorder %s363, %s364
      %p376 = scmp.eq.s32.totalorder %s50, 1
      %p377 = por %p375, %p376
      %p379 = scmp.ne.s32.totalorder %s364, %s378
      %p380 = scmp.eq.s32.totalorder %s50, 0
      %p381 = por %p379, %p380
      %s383 = sadd.s32 %s382, 1
      %p386 = scmp.eq.s32.totalorder %s44, 1
      %p387 = scmp.ne.s32.totalorder %s382, %s384
      %p388 = scmp.eq.s32.totalorder %s44, 0
      %p389 = por %p387, %p388
      %p390 = scmp.ne.s32.totalorder %s382, %s384
      %p391 = scmp.eq.s32.totalorder %s49, 1
      %p392 = por %p390, %p391
      %p393 = scmp.ne.s32.totalorder %s384, %s385
      %p394 = scmp.eq.s32.totalorder %s49, 0
      %p395 = por %p393, %p394
      %p396 = scmp.ne.s32.totalorder %s384, %s385
      %p397 = scmp.eq.s32.totalorder %s50, 1
      %p398 = por %p396, %p397
      %p400 = scmp.ne.s32.totalorder %s385, %s399
      %p401 = scmp.eq.s32.totalorder %s50, 0
      %p402 = por %p400, %p401
      %s404 = sadd.s32 %s403, 1
      %p407 = scmp.eq.s32.totalorder %s44, 1
      %p408 = scmp.ne.s32.totalorder %s403, %s405
      %p409 = scmp.eq.s32.totalorder %s44, 0
      %p410 = por %p408, %p409
      %p411 = scmp.ne.s32.totalorder %s403, %s405
      %p412 = scmp.eq.s32.totalorder %s49, 1
      %p413 = por %p411, %p412
      %p414 = scmp.ne.s32.totalorder %s405, %s406
      %p415 = scmp.eq.s32.totalorder %s49, 0
      %p416 = por %p414, %p415
      %p417 = scmp.ne.s32.totalorder %s405, %s406
      %p418 = scmp.eq.s32.totalorder %s50, 1
      %p419 = por %p417, %p418
      %p421 = scmp.ne.s32.totalorder %s406, %s420
      %p422 = scmp.eq.s32.totalorder %s50, 0
      %p423 = por %p421, %p422
      %s425 = sadd.s32 %s424, 1
      %p428 = scmp.eq.s32.totalorder %s44, 1
      %p429 = scmp.ne.s32.totalorder %s424, %s426
      %p430 = scmp.eq.s32.totalorder %s44, 0
      %p431 = por %p429, %p430
      %p432 = scmp.ne.s32.totalorder %s424, %s426
      %p433 = scmp.eq.s32.totalorder %s49, 1
      %p434 = por %p432, %p433
      %p435 = scmp.ne.s32.totalorder %s426, %s427
      %p436 = scmp.eq.s32.totalorder %s49, 0
      %p437 = por %p435, %p436
      %p438 = scmp.ne.s32.totalorder %s426, %s427
      %p439 = scmp.eq.s32.totalorder %s50, 1
      %p440 = por %p438, %p439
      %p442 = scmp.ne.s32.totalorder %s427, %s441
      %p443 = scmp.eq.s32.totalorder %s50, 0
      %p444 = por %p442, %p443
      %s446 = sadd.s32 %s445, 1
      %p449 = scmp.eq.s32.totalorder %s44, 1
      %p450 = scmp.ne.s32.totalorder %s445, %s447
      %p451 = scmp.eq.s32.totalorder %s44, 0
      %p452 = por %p450, %p451
      %p453 = scmp.ne.s32.totalorder %s445, %s447
      %p454 = scmp.eq.s32.totalorder %s49, 1
      %p455 = por %p453, %p454
      %p456 = scmp.ne.s32.totalorder %s447, %s448
      %p457 = scmp.eq.s32.totalorder %s49, 0
      %p458 = por %p456, %p457
      %p459 = scmp.ne.s32.totalorder %s447, %s448
      %p460 = scmp.eq.s32.totalorder %s50, 1
      %p461 = por %p459, %p460
      %p463 = scmp.ne.s32.totalorder %s448, %s462
      %p464 = scmp.eq.s32.totalorder %s50, 0
      %p465 = por %p463, %p464
      %s467 = sadd.s32 %s466, 1
      %p470 = scmp.eq.s32.totalorder %s44, 1
      %p471 = scmp.ne.s32.totalorder %s466, %s468
      %p472 = scmp.eq.s32.totalorder %s44, 0
      %p473 = por %p471, %p472
      %p474 = scmp.ne.s32.totalorder %s466, %s468
      %p475 = scmp.eq.s32.totalorder %s49, 1
      %p476 = por %p474, %p475
      %p477 = scmp.ne.s32.totalorder %s468, %s469
      %p478 = scmp.eq.s32.totalorder %s49, 0
      %p479 = por %p477, %p478
      %p480 = scmp.ne.s32.totalorder %s468, %s469
      %p481 = scmp.eq.s32.totalorder %s50, 1
      %p482 = por %p480, %p481
      %p484 = scmp.ne.s32.totalorder %s469, %s483
      %p485 = scmp.eq.s32.totalorder %s50, 0
      %p486 = por %p484, %p485
      %s488 = sadd.s32 %s487, 1
      %p491 = scmp.eq.s32.totalorder %s44, 1
      %p492 = scmp.ne.s32.totalorder %s487, %s489
      %p493 = scmp.eq.s32.totalorder %s44, 0
      %p494 = por %p492, %p493
      %p495 = scmp.ne.s32.totalorder %s487, %s489
      %p496 = scmp.eq.s32.totalorder %s49, 1
      %p497 = por %p495, %p496
      %p498 = scmp.ne.s32.totalorder %s489, %s490
      %p499 = scmp.eq.s32.totalorder %s49, 0
      %p500 = por %p498, %p499
      %p501 = scmp.ne.s32.totalorder %s489, %s490
      %p502 = scmp.eq.s32.totalorder %s50, 1
      %p503 = por %p501, %p502
      %p505 = scmp.ne.s32.totalorder %s490, %s504
      %p506 = scmp.eq.s32.totalorder %s50, 0
      %p507 = por %p505, %p506
      %s509 = sadd.s32 %s508, 1
      %p512 = scmp.eq.s32.totalorder %s44, 1
      %p513 = scmp.ne.s32.totalorder %s508, %s510
      %p514 = scmp.eq.s32.totalorder %s44, 0
      %p515 = por %p513, %p514
      %p516 = scmp.ne.s32.totalorder %s508, %s510
      %p517 = scmp.eq.s32.totalorder %s49, 1
      %p518 = por %p516, %p517
      %p519 = scmp.ne.s32.totalorder %s510, %s511
      %p520 = scmp.eq.s32.totalorder %s49, 0
      %p521 = por %p519, %p520
      %p522 = scmp.ne.s32.totalorder %s510, %s511
      %p523 = scmp.eq.s32.totalorder %s50, 1
      %p524 = por %p522, %p523
      %p526 = scmp.ne.s32.totalorder %s511, %s525
      %p527 = scmp.eq.s32.totalorder %s50, 0
      %p528 = por %p526, %p527
      %s530 = sadd.s32 %s529, 1
      %p533 = scmp.eq.s32.totalorder %s44, 1
      %p534 = scmp.ne.s32.totalorder %s529, %s531
      %p535 = scmp.eq.s32.totalorder %s44, 0
      %p536 = por %p534, %p535
      %p537 = scmp.ne.s32.totalorder %s529, %s531
      %p538 = scmp.eq.s32.totalorder %s49, 1
      %p539 = por %p537, %p538
      %p540 = scmp.ne.s32.totalorder %s531, %s532
      %p541 = scmp.eq.s32.totalorder %s49, 0
      %p542 = por %p540, %p541
      %p543 = scmp.ne.s32.totalorder %s531, %s532
      %p544 = scmp.eq.s32.totalorder %s50, 1
      %p545 = por %p543, %p544
      %p547 = scmp.ne.s32.totalorder %s532, %s546
      %p548 = scmp.eq.s32.totalorder %s50, 0
      %p549 = por %p547, %p548
      %s551 = sadd.s32 %s550, 1
      %p554 = scmp.eq.s32.totalorder %s44, 1
      %p555 = scmp.ne.s32.totalorder %s550, %s552
      %p556 = scmp.eq.s32.totalorder %s44, 0
      %p557 = por %p555, %p556
      %p558 = scmp.ne.s32.totalorder %s550, %s552
      %p559 = scmp.eq.s32.totalorder %s49, 1
      %p560 = por %p558, %p559
      %p561 = scmp.ne.s32.totalorder %s552, %s553
      %p562 = scmp.eq.s32.totalorder %s49, 0
      %p563 = por %p561, %p562
      %p564 = scmp.ne.s32.totalorder %s552, %s553
      %p565 = scmp.eq.s32.totalorder %s50, 1
      %p566 = por %p564, %p565
      %p568 = scmp.ne.s32.totalorder %s553, %s567
      %p569 = scmp.eq.s32.totalorder %s50, 0
      %p570 = por %p568, %p569
      %s572 = sadd.s32 %s571, 1
      %p575 = scmp.eq.s32.totalorder %s44, 1
      %p576 = scmp.ne.s32.totalorder %s571, %s573
      %p577 = scmp.eq.s32.totalorder %s44, 0
      %p578 = por %p576, %p577
      %p579 = scmp.ne.s32.totalorder %s571, %s573
      %p580 = scmp.eq.s32.totalorder %s49, 1
      %p581 = por %p579, %p580
      %p582 = scmp.ne.s32.totalorder %s573, %s574
      %p583 = scmp.eq.s32.totalorder %s49, 0
      %p584 = por %p582, %p583
      %p585 = scmp.ne.s32.totalorder %s573, %s574
      %p586 = scmp.eq.s32.totalorder %s50, 1
      %p587 = por %p585, %p586
      %p589 = scmp.ne.s32.totalorder %s574, %s588
      %p590 = scmp.eq.s32.totalorder %s50, 0
      %p591 = por %p589, %p590
      %s592 = ssub.s32 %s44, %s51
      %p593 = scmp.eq.s32.totalorder %s592, 0
      %s595 = sadd.s32 %s594, 1
      %s596 = scalar_select %p593, %s594, %s595
      %p599 = pneg %p593
      %p600 = scmp.eq.s32.totalorder %s44, 1
      %p601 = por %p599, %p600
      %p602 = scmp.ne.s32.totalorder %s594, %s597
      %p603 = scmp.eq.s32.totalorder %s44, 0
      %p604 = por %p602, %p603
      %p605 = scmp.ne.s32.totalorder %s594, %s597
      %p606 = scmp.eq.s32.totalorder %s49, 1
      %p607 = por %p605, %p606
      %p608 = scmp.ne.s32.totalorder %s597, %s598
      %p609 = scmp.eq.s32.totalorder %s49, 0
      %p610 = por %p608, %p609
      %p611 = scmp.ne.s32.totalorder %s597, %s598
      %p612 = scmp.eq.s32.totalorder %s50, 1
      %p613 = por %p611, %p612
      %p615 = scmp.ne.s32.totalorder %s598, %s614
      %p616 = scmp.eq.s32.totalorder %s50, 0
      %p617 = por %p615, %p616
      %p618 = scmp.le.s32.totalorder 1, %s44
      %p619 = scmp.lt.s32.totalorder %s44, 3
      %p620 = pnand %p618, %p619
      %p621 = pneg %p620
      // Predicated region
      $region9: #{tpu_custom_call.1} parent=5 // pred_check
        _
      $region10: #{tpu_custom_call.1} parent=5 // pred_check_branch
        %623 = sbr.rel (%p620) target = $region12
      $region11: #{tpu_custom_call.1} parent=5 // pred_region
        %s624 = ssub.s32 %s44, 1
        // Predicated region
        $region13: #{tpu_custom_call.1} parent=11 // pred_check
          %p625 = pneg %p143
        $region14: #{tpu_custom_call.1} parent=11 // pred_check_branch
          %627 = sbr.rel (%p625) target = $region16
        $region15: #{tpu_custom_call.1} parent=11 // pred_region
          _
        $region16: #{tpu_custom_call.1} parent=11 // pred_fallthru
          _
        // Predicated region
        $region17: #{tpu_custom_call.1} parent=11 // pred_check
          %p628 = pneg %p164
        $region18: #{tpu_custom_call.1} parent=11 // pred_check_branch
          %630 = sbr.rel (%p628) target = $region20
        $region19: #{tpu_custom_call.1} parent=11 // pred_region
          %s632 = ssub.s32 16, 16
          %633 = vsyncadd [#allocation6], %s632
          %s635 = sshll.u32 [#allocation7], 4
          %s636 = int_to_ptr.vmem [resolvable:$true] %s635
          %638 = dma.hbm_to_vmem [thread:$0]  %s4, 16, %s636, [#allocation6]
        $region20: #{tpu_custom_call.1} parent=11 // pred_fallthru
          _
        // Predicated region
        $region21: #{tpu_custom_call.1} parent=11 // pred_check
          %p639 = pneg %p185
        $region22: #{tpu_custom_call.1} parent=11 // pred_check_branch
          %641 = sbr.rel (%p639) target = $region24
        $region23: #{tpu_custom_call.1} parent=11 // pred_region
          _
        $region24: #{tpu_custom_call.1} parent=11 // pred_fallthru
          _
        // Predicated region
        $region25: #{tpu_custom_call.1} parent=11 // pred_check
          %p642 = pneg %p206
        $region26: #{tpu_custom_call.1} parent=11 // pred_check_branch
          %644 = sbr.rel (%p642) target = $region28
        $region27: #{tpu_custom_call.1} parent=11 // pred_region
          %s646 = ssub.s32 16, 16
          %647 = vsyncadd [#allocation9], %s646
          %s649 = sshll.u32 [#allocation8], 4
          %s650 = int_to_ptr.vmem [resolvable:$true] %s649
          %652 = dma.hbm_to_vmem [thread:$0]  %s6, 16, %s650, [#allocation9]
        $region28: #{tpu_custom_call.1} parent=11 // pred_fallthru
          _
        // Predicated region
        $region29: #{tpu_custom_call.1} parent=11 // pred_check
          %p653 = pneg %p227
        $region30: #{tpu_custom_call.1} parent=11 // pred_check_branch
          %655 = sbr.rel (%p653) target = $region32
        $region31: #{tpu_custom_call.1} parent=11 // pred_region
          %s657 = ssub.s32 16, 16
          %658 = vsyncadd [#allocation9], %s657
          %s660 = sshll.u32 [#allocation10], 4
          %s661 = int_to_ptr.vmem [resolvable:$true] %s660
          %663 = dma.hbm_to_vmem [thread:$0]  %s7, 16, %s661, [#allocation9]
        $region32: #{tpu_custom_call.1} parent=11 // pred_fallthru
          _
        // Predicated region
        $region33: #{tpu_custom_call.1} parent=11 // pred_check
          %p664 = pneg %p248
        $region34: #{tpu_custom_call.1} parent=11 // pred_check_branch
          %666 = sbr.rel (%p664) target = $region36
        $region35: #{tpu_custom_call.1} parent=11 // pred_region
          %s668 = ssub.s32 16, 16
          %669 = vsyncadd [#allocation12], %s668
          %s671 = sshll.u32 [#allocation11], 4
          %s672 = int_to_ptr.vmem [resolvable:$true] %s671
          %674 = dma.hbm_to_vmem [thread:$0]  %s8, 16, %s672, [#allocation12]
        $region36: #{tpu_custom_call.1} parent=11 // pred_fallthru
          _
        // Predicated region
        $region37: #{tpu_custom_call.1} parent=11 // pred_check
          %p675 = pneg %p269
        $region38: #{tpu_custom_call.1} parent=11 // pred_check_branch
          %677 = sbr.rel (%p675) target = $region40
        $region39: #{tpu_custom_call.1} parent=11 // pred_region
          _
        $region40: #{tpu_custom_call.1} parent=11 // pred_fallthru
          _
        // Predicated region
        $region41: #{tpu_custom_call.1} parent=11 // pred_check
          %p678 = pneg %p290
        $region42: #{tpu_custom_call.1} parent=11 // pred_check_branch
          %680 = sbr.rel (%p678) target = $region44
        $region43: #{tpu_custom_call.1} parent=11 // pred_region
          %s682 = ssub.s32 16, 16
          %683 = vsyncadd [#allocation12], %s682
          %s685 = sshll.u32 [#allocation13], 4
          %s686 = int_to_ptr.vmem [resolvable:$true] %s685
          %688 = dma.hbm_to_vmem [thread:$0]  %s10, 16, %s686, [#allocation12]
        $region44: #{tpu_custom_call.1} parent=11 // pred_fallthru
          _
        // Predicated region
        $region45: #{tpu_custom_call.1} parent=11 // pred_check
          %p689 = pneg %p311
        $region46: #{tpu_custom_call.1} parent=11 // pred_check_branch
          %691 = sbr.rel (%p689) target = $region48
        $region47: #{tpu_custom_call.1} parent=11 // pred_region
          _
        $region48: #{tpu_custom_call.1} parent=11 // pred_fallthru
          _
        // Predicated region
        $region49: #{tpu_custom_call.1} parent=11 // pred_check
          %p692 = pneg %p332
        $region50: #{tpu_custom_call.1} parent=11 // pred_check_branch
          %694 = sbr.rel (%p692) target = $region52
        $region51: #{tpu_custom_call.1} parent=11 // pred_region
          %s696 = ssub.s32 16, 16
          %697 = vsyncadd [#allocation15], %s696
          %s699 = sshll.u32 [#allocation14], 4
          %s700 = int_to_ptr.vmem [resolvable:$true] %s699
          %702 = dma.hbm_to_vmem [thread:$0]  %s12, 16, %s700, [#allocation15]
        $region52: #{tpu_custom_call.1} parent=11 // pred_fallthru
          _
        // Predicated region
        $region53: #{tpu_custom_call.1} parent=11 // pred_check
          %p703 = pneg %p353
        $region54: #{tpu_custom_call.1} parent=11 // pred_check_branch
          %705 = sbr.rel (%p703) target = $region56
        $region55: #{tpu_custom_call.1} parent=11 // pred_region
          _
        $region56: #{tpu_custom_call.1} parent=11 // pred_fallthru
          _
        // Predicated region
        $region57: #{tpu_custom_call.1} parent=11 // pred_check
          %p706 = pneg %p374
        $region58: #{tpu_custom_call.1} parent=11 // pred_check_branch
          %708 = sbr.rel (%p706) target = $region60
        $region59: #{tpu_custom_call.1} parent=11 // pred_region
          %s710 = ssub.s32 16, 16
          %711 = vsyncadd [#allocation15], %s710
          %s713 = sshll.u32 [#allocation16], 4
          %s714 = int_to_ptr.vmem [resolvable:$true] %s713
          %716 = dma.hbm_to_vmem [thread:$0]  %s14, 16, %s714, [#allocation15]
        $region60: #{tpu_custom_call.1} parent=11 // pred_fallthru
          _
        // Predicated region
        $region61: #{tpu_custom_call.1} parent=11 // pred_check
          %p717 = pneg %p395
        $region62: #{tpu_custom_call.1} parent=11 // pred_check_branch
          %719 = sbr.rel (%p717) target = $region64
        $region63: #{tpu_custom_call.1} parent=11 // pred_region
          _
        $region64: #{tpu_custom_call.1} parent=11 // pred_fallthru
          _
        // Predicated region
        $region65: #{tpu_custom_call.1} parent=11 // pred_check
          %p720 = pneg %p416
        $region66: #{tpu_custom_call.1} parent=11 // pred_check_branch
          %722 = sbr.rel (%p720) target = $region68
        $region67: #{tpu_custom_call.1} parent=11 // pred_region
          %s724 = ssub.s32 16, 16
          %725 = vsyncadd [#allocation18], %s724
          %s727 = sshll.u32 [#allocation17], 4
          %s728 = int_to_ptr.vmem [resolvable:$true] %s727
          %730 = dma.hbm_to_vmem [thread:$0]  %s16, 16, %s728, [#allocation18]
        $region68: #{tpu_custom_call.1} parent=11 // pred_fallthru
          _
        // Predicated region
        $region69: #{tpu_custom_call.1} parent=11 // pred_check
          %p731 = pneg %p437
        $region70: #{tpu_custom_call.1} parent=11 // pred_check_branch
          %733 = sbr.rel (%p731) target = $region72
        $region71: #{tpu_custom_call.1} parent=11 // pred_region
          %s735 = ssub.s32 16, 16
          %736 = vsyncadd [#allocation18], %s735
          %s738 = sshll.u32 [#allocation19], 4
          %s739 = int_to_ptr.vmem [resolvable:$true] %s738
          %741 = dma.hbm_to_vmem [thread:$0]  %s17, 16, %s739, [#allocation18]
        $region72: #{tpu_custom_call.1} parent=11 // pred_fallthru
          _
        // Predicated region
        $region73: #{tpu_custom_call.1} parent=11 // pred_check
          %p742 = pneg %p458
        $region74: #{tpu_custom_call.1} parent=11 // pred_check_branch
          %744 = sbr.rel (%p742) target = $region76
        $region75: #{tpu_custom_call.1} parent=11 // pred_region
          _
        $region76: #{tpu_custom_call.1} parent=11 // pred_fallthru
          _
        // Predicated region
        $region77: #{tpu_custom_call.1} parent=11 // pred_check
          %p745 = pneg %p479
        $region78: #{tpu_custom_call.1} parent=11 // pred_check_branch
          %747 = sbr.rel (%p745) target = $region80
        $region79: #{tpu_custom_call.1} parent=11 // pred_region
          _
        $region80: #{tpu_custom_call.1} parent=11 // pred_fallthru
          _
        // Predicated region
        $region81: #{tpu_custom_call.1} parent=11 // pred_check
          %p748 = pneg %p500
        $region82: #{tpu_custom_call.1} parent=11 // pred_check_branch
          %750 = sbr.rel (%p748) target = $region84
        $region83: #{tpu_custom_call.1} parent=11 // pred_region
          _
        $region84: #{tpu_custom_call.1} parent=11 // pred_fallthru
          _
        // Predicated region
        $region85: #{tpu_custom_call.1} parent=11 // pred_check
          %p751 = pneg %p521
        $region86: #{tpu_custom_call.1} parent=11 // pred_check_branch
          %753 = sbr.rel (%p751) target = $region88
        $region87: #{tpu_custom_call.1} parent=11 // pred_region
          _
        $region88: #{tpu_custom_call.1} parent=11 // pred_fallthru
          _
        // Predicated region
        $region89: #{tpu_custom_call.1} parent=11 // pred_check
          %p754 = pneg %p542
        $region90: #{tpu_custom_call.1} parent=11 // pred_check_branch
          %756 = sbr.rel (%p754) target = $region92
        $region91: #{tpu_custom_call.1} parent=11 // pred_region
          _
        $region92: #{tpu_custom_call.1} parent=11 // pred_fallthru
          _
        // Predicated region
        $region93: #{tpu_custom_call.1} parent=11 // pred_check
          %p757 = pneg %p563
        $region94: #{tpu_custom_call.1} parent=11 // pred_check_branch
          %759 = sbr.rel (%p757) target = $region96
        $region95: #{tpu_custom_call.1} parent=11 // pred_region
          _
        $region96: #{tpu_custom_call.1} parent=11 // pred_fallthru
          _
        // Predicated region
        $region97: #{tpu_custom_call.1} parent=11 // pred_check
          %p760 = pneg %p584
        $region98: #{tpu_custom_call.1} parent=11 // pred_check_branch
          %762 = sbr.rel (%p760) target = $region100
        $region99: #{tpu_custom_call.1} parent=11 // pred_region
          _
        $region100: #{tpu_custom_call.1} parent=11 // pred_fallthru
          _
      $region12: #{tpu_custom_call.1} parent=5 // pred_fallthru
        _
      %p763 = scmp.lt.s32.totalorder %s44, 2
      // Predicated region
      $region101: #{tpu_custom_call.1} parent=5 // pred_check
        %p764 = pneg %p763
      $region102: #{tpu_custom_call.1} parent=5 // pred_check_branch
        %766 = sbr.rel (%p764) target = $region104
      $region103: #{tpu_custom_call.1} parent=5 // pred_region
        // Predicated region
        $region105: #{tpu_custom_call.1} parent=103 // pred_check
          %p767 = pneg %p64
        $region106: #{tpu_custom_call.1} parent=103 // pred_check_branch
          %769 = sbr.rel (%p767) target = $region108
        $region107: #{tpu_custom_call.1} parent=103 // pred_region
          %p770 = scmp.lt.s32.totalorder %s44, 1
          %s771 = scalar_select %p770, %s44, 1
          %s772 = smul.addr %s771, 8
          %s773 = scalar_lea.vmem %s0, %s772
        $region108: #{tpu_custom_call.1} parent=103 // pred_fallthru
          _
        // Predicated region
        $region109: #{tpu_custom_call.1} parent=103 // pred_check
          %p774 = pneg %p90
        $region110: #{tpu_custom_call.1} parent=103 // pred_check_branch
          %776 = sbr.rel (%p774) target = $region112
        $region111: #{tpu_custom_call.1} parent=103 // pred_region
          %s777 = sand.u32 %s80, 1
          %s778 = scalar_lea.sflag [#allocation3], %s777
          %s779 = sand.u32 %s80, 1
          %s780 = smul.addr %s779, 4
          %s781 = scalar_lea.vmem [#allocation2], %s780
          %s783 = ssub.s32 64, 64
          %784 = vsyncadd %s778, %s783
          %s785 = smul.addr %s44, 64
          %s786 = scalar_lea.hbm %s1, %s785
          %s788 = sshll.u32 %s781, 4
          %s789 = int_to_ptr.vmem [resolvable:$true] %s788
          %791 = dma.hbm_to_vmem [thread:$0]  %s786, 64, %s789, %s778
        $region112: #{tpu_custom_call.1} parent=103 // pred_fallthru
          _
        // Predicated region
        $region113: #{tpu_custom_call.1} parent=103 // pred_check
          %p792 = pneg %p116
        $region114: #{tpu_custom_call.1} parent=103 // pred_check_branch
          %794 = sbr.rel (%p792) target = $region116
        $region115: #{tpu_custom_call.1} parent=103 // pred_region
          %s795 = sand.u32 %s44, 1
          %s796 = scalar_lea.sflag [#allocation6], %s795
          %s797 = sand.u32 %s106, 1
          %s798 = smul.addr %s797, 4
          %s799 = scalar_lea.vmem [#allocation5], %s798
          %s801 = ssub.s32 64, 64
          %802 = vsyncadd %s796, %s801
          %s803 = smul.addr %s44, 64
          %s804 = scalar_lea.hbm %s2, %s803
          %s806 = sshll.u32 %s799, 4
          %s807 = int_to_ptr.vmem [resolvable:$true] %s806
          %809 = dma.hbm_to_vmem [thread:$0]  %s804, 64, %s807, %s796
        $region116: #{tpu_custom_call.1} parent=103 // pred_fallthru
          _
      $region104: #{tpu_custom_call.1} parent=5 // pred_fallthru
        _
      %p810 = scmp.le.s32.totalorder 1, %s44
      %p811 = scmp.lt.s32.totalorder %s44, 3
      %p812 = pnand %p810, %p811
      %p813 = pneg %p812
      // Predicated region
      $region117: #{tpu_custom_call.1} parent=5 // pred_check
        _
      $region118: #{tpu_custom_call.1} parent=5 // pred_check_branch
        %815 = sbr.rel (%p812) target = $region120
      $region119: #{tpu_custom_call.1} parent=5 // pred_region
        %s816 = ssub.s32 %s44, 1
        %s817 = sand.u32 %s83, 1
        %s818 = scalar_lea.sflag [#allocation3], %s817
        %s819 = sand.u32 %s83, 1
        %s820 = smul.addr %s819, 4
        %s821 = scalar_lea.vmem [#allocation2], %s820
        // Predicated region
        $region121: #{tpu_custom_call.1} parent=119 // pred_check
          %p822 = pneg %p96
        $region122: #{tpu_custom_call.1} parent=119 // pred_check_branch
          %824 = sbr.rel (%p822) target = $region124
        $region123: #{tpu_custom_call.1} parent=119 // pred_region
          %825 = dma.done %s818, 64
        $region124: #{tpu_custom_call.1} parent=119 // pred_fallthru
          _
        %s826 = sand.u32 %s49, 1
        %s827 = scalar_lea.sflag [#allocation6], %s826
        %s828 = sand.u32 %s109, 1
        %s829 = smul.addr %s828, 4
        %s830 = scalar_lea.vmem [#allocation5], %s829
        // Predicated region
        $region125: #{tpu_custom_call.1} parent=119 // pred_check
          %p831 = pneg %p122
        $region126: #{tpu_custom_call.1} parent=119 // pred_check_branch
          %833 = sbr.rel (%p831) target = $region128
        $region127: #{tpu_custom_call.1} parent=119 // pred_region
          %834 = dma.done %s827, 64
        $region128: #{tpu_custom_call.1} parent=119 // pred_fallthru
          _
        // Predicated region
        $region129: #{tpu_custom_call.1} parent=119 // pred_check
          %p835 = pneg %p164
        $region130: #{tpu_custom_call.1} parent=119 // pred_check_branch
          %837 = sbr.rel (%p835) target = $region132
        $region131: #{tpu_custom_call.1} parent=119 // pred_region
          %838 = dma.done [#allocation6], 16
        $region132: #{tpu_custom_call.1} parent=119 // pred_fallthru
          _
        // Predicated region
        $region133: #{tpu_custom_call.1} parent=119 // pred_check
          %p839 = pneg %p206
        $region134: #{tpu_custom_call.1} parent=119 // pred_check_branch
          %841 = sbr.rel (%p839) target = $region136
        $region135: #{tpu_custom_call.1} parent=119 // pred_region
          %842 = dma.done [#allocation9], 16
        $region136: #{tpu_custom_call.1} parent=119 // pred_fallthru
          _
        // Predicated region
        $region137: #{tpu_custom_call.1} parent=119 // pred_check
          %p843 = pneg %p227
        $region138: #{tpu_custom_call.1} parent=119 // pred_check_branch
          %845 = sbr.rel (%p843) target = $region140
        $region139: #{tpu_custom_call.1} parent=119 // pred_region
          %846 = dma.done [#allocation9], 16
        $region140: #{tpu_custom_call.1} parent=119 // pred_fallthru
          _
        // Predicated region
        $region141: #{tpu_custom_call.1} parent=119 // pred_check
          %p847 = pneg %p248
        $region142: #{tpu_custom_call.1} parent=119 // pred_check_branch
          %849 = sbr.rel (%p847) target = $region144
        $region143: #{tpu_custom_call.1} parent=119 // pred_region
          %850 = dma.done [#allocation12], 16
        $region144: #{tpu_custom_call.1} parent=119 // pred_fallthru
          _
        // Predicated region
        $region145: #{tpu_custom_call.1} parent=119 // pred_check
          %p851 = pneg %p290
        $region146: #{tpu_custom_call.1} parent=119 // pred_check_branch
          %853 = sbr.rel (%p851) target = $region148
        $region147: #{tpu_custom_call.1} parent=119 // pred_region
          %854 = dma.done [#allocation12], 16
        $region148: #{tpu_custom_call.1} parent=119 // pred_fallthru
          _
        // Predicated region
        $region149: #{tpu_custom_call.1} parent=119 // pred_check
          %p855 = pneg %p332
        $region150: #{tpu_custom_call.1} parent=119 // pred_check_branch
          %857 = sbr.rel (%p855) target = $region152
        $region151: #{tpu_custom_call.1} parent=119 // pred_region
          %858 = dma.done [#allocation15], 16
        $region152: #{tpu_custom_call.1} parent=119 // pred_fallthru
          _
        // Predicated region
        $region153: #{tpu_custom_call.1} parent=119 // pred_check
          %p859 = pneg %p374
        $region154: #{tpu_custom_call.1} parent=119 // pred_check_branch
          %861 = sbr.rel (%p859) target = $region156
        $region155: #{tpu_custom_call.1} parent=119 // pred_region
          %862 = dma.done [#allocation15], 16
        $region156: #{tpu_custom_call.1} parent=119 // pred_fallthru
          _
        // Predicated region
        $region157: #{tpu_custom_call.1} parent=119 // pred_check
          %p863 = pneg %p416
        $region158: #{tpu_custom_call.1} parent=119 // pred_check_branch
          %865 = sbr.rel (%p863) target = $region160
        $region159: #{tpu_custom_call.1} parent=119 // pred_region
          %866 = dma.done [#allocation18], 16
        $region160: #{tpu_custom_call.1} parent=119 // pred_fallthru
          _
        // Predicated region
        $region161: #{tpu_custom_call.1} parent=119 // pred_check
          %p867 = pneg %p437
        $region162: #{tpu_custom_call.1} parent=119 // pred_check_branch
          %869 = sbr.rel (%p867) target = $region164
        $region163: #{tpu_custom_call.1} parent=119 // pred_region
          %870 = dma.done [#allocation18], 16
        $region164: #{tpu_custom_call.1} parent=119 // pred_fallthru
          _
        %p871 = scmp.lt.s32.totalorder %s49, 1
        %s872 = scalar_select %p871, %s49, 1
        %s873 = smul.addr %s872, 8
        %s874 = scalar_lea.vmem %s0, %s873
        %p875 = pneg %p70
        %p876 = pneg %p67
        %s877 = sand.u32 %s83, 1
        %s878 = scalar_lea.sflag [#allocation3], %s877
        %s879 = sand.u32 %s83, 1
        %s880 = smul.addr %s879, 4
        %s881 = scalar_lea.vmem [#allocation2], %s880
        %p882 = pneg %p96
        %p883 = pneg %p93
        %s884 = sand.u32 %s49, 1
        %s885 = scalar_lea.sflag [#allocation6], %s884
        %s886 = sand.u32 %s109, 1
        %s887 = smul.addr %s886, 4
        %s888 = scalar_lea.vmem [#allocation5], %s887
        %p889 = pneg %p122
        %p890 = pneg %p119
        %p891 = pneg %p143
        %p892 = pneg %p140
        %p893 = pneg %p164
        %p894 = pneg %p161
        %p895 = pneg %p185
        %p896 = pneg %p182
        %p897 = pneg %p206
        %p898 = pneg %p203
        %p899 = pneg %p227
        %p900 = pneg %p224
        %p901 = pneg %p248
        %p902 = pneg %p245
        %p903 = pneg %p269
        %p904 = pneg %p266
        %p905 = pneg %p290
        %p906 = pneg %p287
        %p907 = pneg %p311
        %p908 = pneg %p308
        %p909 = pneg %p332
        %p910 = pneg %p329
        %p911 = pneg %p353
        %p912 = pneg %p350
        %p913 = pneg %p374
        %p914 = pneg %p371
        %p915 = pneg %p395
        %p916 = pneg %p392
        %p917 = pneg %p416
        %p918 = pneg %p413
        %p919 = pneg %p437
        %p920 = pneg %p434
        %p921 = pneg %p458
        %p922 = pneg %p455
        %p923 = pneg %p479
        %p924 = pneg %p476
        %p925 = pneg %p500
        %p926 = pneg %p497
        %p927 = pneg %p521
        %p928 = pneg %p518
        %p929 = pneg %p542
        %p930 = pneg %p539
        %p931 = pneg %p563
        %p932 = pneg %p560
        %p933 = pneg %p584
        %p934 = pneg %p581
        %p935 = pneg %p610
        %p936 = pneg %p607
        %s937 = sand.u32 %s597, 1
        %s938 = scalar_lea.sflag [#allocation4], %s937
        %s939 = sand.u32 %s597, 1
        %s940 = smul.addr %s939, 8
        %s941 = scalar_lea.vmem [#allocation20], %s940
        %p942 = scmp.lt.s32.totalorder %s49, 1
        %s943 = scalar_select %p942, %s49, 1
        %s944 = smul.addr %s943, 8
        %s945 = scalar_lea.vmem %s0, %s944
        %v947 = vld [vmem:[%s945] sm:$0xff]
        %v948 = vld [vmem:[%s821] sm:$0xf]
        %v949 = vunpack.c.l.bf16 %v948
        %vm950 = vcmask 64512
        %v951 = vsel %vm950, %v949, 0.0
        %952 = vadd.xlane.f32.xlu0 %v951
        %v953 = vpop.xlane.xlu0 %952
        %v954 = vadd.f32 %v953, 1.0
        %v955 = vrsqrt.pop %v954
        %v956 = vmul.f32 %v955, %v955
        %v957 = vmul.f32 %v955, %v949
        %958 = vxpose.xlu0.b32.start [1/16] %v955, 128
        %959 = vxpose.xlu0.b32.cont [2/16] 0.0, 128
        %960 = vxpose.xlu0.b32.cont [3/16] 0.0, 128
        %961 = vxpose.xlu0.b32.cont [4/16] 0.0, 128
        %962 = vxpose.xlu0.b32.cont [5/16] 0.0, 128
        %963 = vxpose.xlu0.b32.cont [6/16] 0.0, 128
        %964 = vxpose.xlu0.b32.cont [7/16] 0.0, 128
        %965 = vxpose.xlu0.b32.cont [8/16] 0.0, 128
        %966 = vxpose.xlu0.b32.cont [9/16] 0.0, 128
        %967 = vxpose.xlu0.b32.cont [10/16] 0.0, 128
        %968 = vxpose.xlu0.b32.cont [11/16] 0.0, 128
        %969 = vxpose.xlu0.b32.cont [12/16] 0.0, 128
        %970 = vxpose.xlu0.b32.cont [13/16] 0.0, 128
        %971 = vxpose.xlu0.b32.cont [14/16] 0.0, 128
        %972 = vxpose.xlu0.b32.cont [15/16] 0.0, 128
        %973 = vxpose.xlu0.b32.end [16/16] 0.0, 128
        %v974 = vpop.trf.xlu0
        %v975 = vpop.trf.xlu0
        %v976 = vpop.trf.xlu0
        %v977 = vpop.trf.xlu0
        %v978 = vpop.trf.xlu0
        %v979 = vpop.trf.xlu0
        %v980 = vpop.trf.xlu0
        %v981 = vpop.trf.xlu0
        %v982 = vpop.trf.xlu0
        %v983 = vpop.trf.xlu0
        %v984 = vpop.trf.xlu0
        %v985 = vpop.trf.xlu0
        %v986 = vpop.trf.xlu0
        %v987 = vpop.trf.xlu0
        %v988 = vpop.trf.xlu0
        %v989 = vpop.trf.xlu0
        %v990 = vlaneseq
        %v991 = vshrl.u32 %v990, 7
        %v992 = vsub.s32 0, %v991
        %v993 = vrot.slane %v974, %v992
        %v994 = vmul.f32 %v957, %v993
        %v995 = vpack.c.bf16 %v994, %v994
        %v996 = vpack.c.bf16 %v947, %v947
        %v997 = vmul.f32 %v956, %v947
        %v999 = vsel %vm950, %v995, 0
        %vm1001 = vcmask 1043456
        %v1003 = vsel %vm1001, %v996, 0
        %1005 = vmatprep.subr.bf16.mxu0 0
        %1006 = vmatpush1.bf16.msra.mxu0 %v1003
        %1007 = vmatprep.subr.bf16.mxu0 0
        %1008 = vmatpush1.bf16.msra.mxu0 0
        %1009 = vmatprep.subr.bf16.mxu0 0
        %1010 = vmatpush1.bf16.msra.mxu0 0
        %1011 = vmatprep.subr.bf16.mxu0 0
        %1012 = vmatpush1.bf16.msra.mxu0 0
        %1013 = vmatprep.subr.bf16.mxu0 0
        %1014 = vmatpush1.bf16.msra.mxu0 0
        %1015 = vmatprep.subr.bf16.mxu0 0
        %1016 = vmatpush1.bf16.msra.mxu0 0
        %1017 = vmatprep.subr.bf16.mxu0 0
        %1018 = vmatpush1.bf16.msra.mxu0 0
        %1019 = vmatprep.subr.bf16.mxu0 0
        %1020 = vmatpush1.bf16.msra.mxu0 0
        %1021 = vmatprep.subr.bf16.mxu0 0
        %1022 = vmatpush1.bf16.msra.mxu0 0
        %1023 = vmatprep.subr.bf16.mxu0 0
        %1024 = vmatpush1.bf16.msra.mxu0 0
        %1025 = vmatprep.subr.bf16.mxu0 0
        %1026 = vmatpush1.bf16.msra.mxu0 0
        %1027 = vmatprep.subr.bf16.mxu0 0
        %1028 = vmatpush1.bf16.msra.mxu0 0
        %1029 = vmatprep.subr.bf16.mxu0 0
        %1030 = vmatpush1.bf16.msra.mxu0 0
        %1031 = vmatprep.subr.bf16.mxu0 0
        %1032 = vmatpush1.bf16.msra.mxu0 0
        %1033 = vmatprep.subr.bf16.mxu0 0
        %1034 = vmatpush1.bf16.msra.mxu0 0
        %1035 = vmatprep.subr.bf16.mxu0 0
        %1036 = vmatpush1.bf16.msra.mxu0 0
        %1037 = vmatprep.mubr.bf16.mxu0 0
        %1038 = vmatmul.mubr.bf16.gmra.mrb[0].mxu0 %v999
        %v1039 = vpop.f32.mrb[0].mxu0
        %v1040 = vadd.f32 %v997, %v1039
        %v1041 = vpop.f32.mrb[0].mxu0
        %v1042 = vpop.f32.mrb[0].mxu0
        %v1043 = vpop.f32.mrb[0].mxu0
        %1044 = vdwg.mxu0
        %v1045 = vpack.c.bf16 %v1040, %v1040
        %v1046 = vld [vmem:[%s3] sm:$0xf]
        %v1047 = vld [vmem:[%s3 + $0x4] sm:$0xf]
        %v1048 = vld [vmem:[%s3 + $0x8] sm:$0xf]
        %v1049 = vld [vmem:[%s3 + $0xc] sm:$0xf]
        %v1050 = vld [vmem:[#allocation7] sm:$0x1]
        %v1052 = vlaneseq
        %v1053 = vshrl.u32 %v1052, 7
        %v1054 = vsub.s32 0, %v1053
        %v1055 = vrot.slane %v1050, %v1054
        %v1061 = vunpack.c.l.b16 %v1046
        %v1062 = vunpack.c.l.b16 %v1047
        %v1063 = vunpack.c.l.b16 %v1048
        %v1064 = vunpack.c.l.b16 %v1049
        %v1065 = vpack.c.b16 %v1062, %v1061
        %v1066 = vpack.c.b16 %v1064, %v1063
        %vm1069 = vcmask 261120
        %v1071 = vsel %vm1069, %v1045, 0
        %1073 = vmatprep.subr.bf16.mxu0 0
        %1074 = vmatpush1.bf16.msra.mxu0 %v1065
        %1075 = vmatprep.subr.bf16.mxu0 0
        %1076 = vmatpush1.bf16.msra.mxu0 %v1066
        %1077 = vmatprep.subr.bf16.mxu0 0
        %1078 = vmatpush1.bf16.msra.mxu0 0
        %1079 = vmatprep.subr.bf16.mxu0 0
        %1080 = vmatpush1.bf16.msra.mxu0 0
        %1081 = vmatprep.subr.bf16.mxu0 0
        %1082 = vmatpush1.bf16.msra.mxu0 0
        %1083 = vmatprep.subr.bf16.mxu0 0
        %1084 = vmatpush1.bf16.msra.mxu0 0
        %1085 = vmatprep.subr.bf16.mxu0 0
        %1086 = vmatpush1.bf16.msra.mxu0 0
        %1087 = vmatprep.subr.bf16.mxu0 0
        %1088 = vmatpush1.bf16.msra.mxu0 0
        %1089 = vmatprep.subr.bf16.mxu0 0
        %1090 = vmatpush1.bf16.msra.mxu0 0
        %1091 = vmatprep.subr.bf16.mxu0 0
        %1092 = vmatpush1.bf16.msra.mxu0 0
        %1093 = vmatprep.subr.bf16.mxu0 0
        %1094 = vmatpush1.bf16.msra.mxu0 0
        %1095 = vmatprep.subr.bf16.mxu0 0
        %1096 = vmatpush1.bf16.msra.mxu0 0
        %1097 = vmatprep.subr.bf16.mxu0 0
        %1098 = vmatpush1.bf16.msra.mxu0 0
        %1099 = vmatprep.subr.bf16.mxu0 0
        %1100 = vmatpush1.bf16.msra.mxu0 0
        %1101 = vmatprep.subr.bf16.mxu0 0
        %1102 = vmatpush1.bf16.msra.mxu0 0
        %1103 = vmatprep.subr.bf16.mxu0 0
        %1104 = vmatpush1.bf16.msra.mxu0 0
        %1105 = vmatprep.mubr.bf16.mxu0 0
        %1106 = vmatmul.mubr.bf16.gmra.mrb[0].mxu0 %v1071
        %v1107 = vpop.f32.mrb[0].mxu0
        %v1108 = vadd.f32 %v1055, %v1107
        %v1109 = vpop.f32.mrb[0].mxu0
        %v1110 = vpop.f32.mrb[0].mxu0
        %v1111 = vpop.f32.mrb[0].mxu0
        %1112 = vdwg.mxu0
        %v1113 = vmax.f32 %v1108, 0.0
        %v1114 = vpack.c.bf16 %v1113, %v1113
        %v1115 = vmul.f32 %v956, %v1113
        %v1117 = vsel %vm1001, %v1114, 0
        %1119 = vmatprep.subr.bf16.mxu0 0
        %1120 = vmatpush1.bf16.msra.mxu0 %v1117
        %1121 = vmatprep.subr.bf16.mxu0 0
        %1122 = vmatpush1.bf16.msra.mxu0 0
        %1123 = vmatprep.subr.bf16.mxu0 0
        %1124 = vmatpush1.bf16.msra.mxu0 0
        %1125 = vmatprep.subr.bf16.mxu0 0
        %1126 = vmatpush1.bf16.msra.mxu0 0
        %1127 = vmatprep.subr.bf16.mxu0 0
        %1128 = vmatpush1.bf16.msra.mxu0 0
        %1129 = vmatprep.subr.bf16.mxu0 0
        %1130 = vmatpush1.bf16.msra.mxu0 0
        %1131 = vmatprep.subr.bf16.mxu0 0
        %1132 = vmatpush1.bf16.msra.mxu0 0
        %1133 = vmatprep.subr.bf16.mxu0 0
        %1134 = vmatpush1.bf16.msra.mxu0 0
        %1135 = vmatprep.subr.bf16.mxu0 0
        %1136 = vmatpush1.bf16.msra.mxu0 0
        %1137 = vmatprep.subr.bf16.mxu0 0
        %1138 = vmatpush1.bf16.msra.mxu0 0
        %1139 = vmatprep.subr.bf16.mxu0 0
        %1140 = vmatpush1.bf16.msra.mxu0 0
        %1141 = vmatprep.subr.bf16.mxu0 0
        %1142 = vmatpush1.bf16.msra.mxu0 0
        %1143 = vmatprep.subr.bf16.mxu0 0
        %1144 = vmatpush1.bf16.msra.mxu0 0
        %1145 = vmatprep.subr.bf16.mxu0 0
        %1146 = vmatpush1.bf16.msra.mxu0 0
        %1147 = vmatprep.subr.bf16.mxu0 0
        %1148 = vmatpush1.bf16.msra.mxu0 0
        %1149 = vmatprep.subr.bf16.mxu0 0
        %1150 = vmatpush1.bf16.msra.mxu0 0
        %1151 = vmatprep.mubr.bf16.mxu0 0
        %1152 = vmatmul.mubr.bf16.gmra.mrb[0].mxu0 %v999
        %v1153 = vpop.f32.mrb[0].mxu0
        %v1154 = vadd.f32 %v1115, %v1153
        %v1155 = vpop.f32.mrb[0].mxu0
        %v1156 = vpop.f32.mrb[0].mxu0
        %v1157 = vpop.f32.mrb[0].mxu0
        %1158 = vdwg.mxu0
        %v1159 = vpack.c.bf16 %v1154, %v1154
        %v1160 = vld [vmem:[%s5] sm:$0xf]
        %v1161 = vld [vmem:[%s5 + $0x4] sm:$0xf]
        %v1162 = vld [vmem:[%s5 + $0x8] sm:$0xf]
        %v1163 = vld [vmem:[%s5 + $0xc] sm:$0xf]
        %v1164 = vld [vmem:[#allocation8] sm:$0x1]
        %v1166 = vlaneseq
        %v1167 = vshrl.u32 %v1166, 7
        %v1168 = vsub.s32 0, %v1167
        %v1169 = vrot.slane %v1164, %v1168
        %v1175 = vunpack.c.l.b16 %v1160
        %v1176 = vunpack.c.l.b16 %v1161
        %v1177 = vunpack.c.l.b16 %v1162
        %v1178 = vunpack.c.l.b16 %v1163
        %v1179 = vpack.c.b16 %v1176, %v1175
        %v1180 = vpack.c.b16 %v1178, %v1177
        %v1184 = vsel %vm1069, %v1159, 0
        %1186 = vmatprep.subr.bf16.mxu0 0
        %1187 = vmatpush1.bf16.msra.mxu0 %v1179
        %1188 = vmatprep.subr.bf16.mxu0 0
        %1189 = vmatpush1.bf16.msra.mxu0 %v1180
        %1190 = vmatprep.subr.bf16.mxu0 0
        %1191 = vmatpush1.bf16.msra.mxu0 0
        %1192 = vmatprep.subr.bf16.mxu0 0
        %1193 = vmatpush1.bf16.msra.mxu0 0
        %1194 = vmatprep.subr.bf16.mxu0 0
        %1195 = vmatpush1.bf16.msra.mxu0 0
        %1196 = vmatprep.subr.bf16.mxu0 0
        %1197 = vmatpush1.bf16.msra.mxu0 0
        %1198 = vmatprep.subr.bf16.mxu0 0
        %1199 = vmatpush1.bf16.msra.mxu0 0
        %1200 = vmatprep.subr.bf16.mxu0 0
        %1201 = vmatpush1.bf16.msra.mxu0 0
        %1202 = vmatprep.subr.bf16.mxu0 0
        %1203 = vmatpush1.bf16.msra.mxu0 0
        %1204 = vmatprep.subr.bf16.mxu0 0
        %1205 = vmatpush1.bf16.msra.mxu0 0
        %1206 = vmatprep.subr.bf16.mxu0 0
        %1207 = vmatpush1.bf16.msra.mxu0 0
        %1208 = vmatprep.subr.bf16.mxu0 0
        %1209 = vmatpush1.bf16.msra.mxu0 0
        %1210 = vmatprep.subr.bf16.mxu0 0
        %1211 = vmatpush1.bf16.msra.mxu0 0
        %1212 = vmatprep.subr.bf16.mxu0 0
        %1213 = vmatpush1.bf16.msra.mxu0 0
        %1214 = vmatprep.subr.bf16.mxu0 0
        %1215 = vmatpush1.bf16.msra.mxu0 0
        %1216 = vmatprep.subr.bf16.mxu0 0
        %1217 = vmatpush1.bf16.msra.mxu0 0
        %1218 = vmatprep.mubr.bf16.mxu0 0
        %1219 = vmatmul.mubr.bf16.gmra.mrb[0].mxu0 %v1184
        %v1220 = vpop.f32.mrb[0].mxu0
        %v1221 = vadd.f32 %v1169, %v1220
        %v1222 = vpop.f32.mrb[0].mxu0
        %v1223 = vpop.f32.mrb[0].mxu0
        %v1224 = vpop.f32.mrb[0].mxu0
        %1225 = vdwg.mxu0
        %v1226 = vadd.f32 %v947, %v1221
        %v1227 = vld [vmem:[#allocation10] sm:$0x1]
        %v1228 = vld [vmem:[#allocation11] sm:$0x1]
        %v1229 = vsel %vm1069, %v1226, 0.0
        %1230 = vadd.xlane.f32.xlu0 %v1229
        %v1231 = vpop.xlane.xlu0 %1230
        %v1232 = vrcp.pop 32.0
        %v1233 = vmul.f32 %v1231, %v1232
        %v1234 = vsub.f32 %v1226, %v1233
        %v1235 = vmul.f32 %v1234, %v1234
        %v1236 = vsel %vm1069, %v1235, 0.0
        %1237 = vadd.xlane.f32.xlu0 %v1236
        %v1238 = vpop.xlane.xlu0 %1237
        %v1239 = vmul.f32 %v1238, %v1232
        %v1240 = vadd.f32 %v1239, 1e-05
        %v1241 = vrsqrt.pop %v1240
        %v1242 = vmul.f32 %v1234, %v1241
        %v1244 = vlaneseq
        %v1245 = vshrl.u32 %v1244, 7
        %v1246 = vsub.s32 0, %v1245
        %v1247 = vrot.slane %v1227, %v1246
        %v1249 = vmul.f32 %v1242, %v1247
        %v1251 = vlaneseq
        %v1252 = vshrl.u32 %v1251, 7
        %v1253 = vsub.s32 0, %v1252
        %v1254 = vrot.slane %v1228, %v1253
        %v1256 = vadd.f32 %v1249, %v1254
        %v1257 = vpack.c.bf16 %v1256, %v1256
        %v1258 = vld [vmem:[%s9] sm:$0xf]
        %v1259 = vld [vmem:[%s9 + $0x4] sm:$0xf]
        %v1260 = vld [vmem:[%s9 + $0x8] sm:$0xf]
        %v1261 = vld [vmem:[%s9 + $0xc] sm:$0xf]
        %v1262 = vld [vmem:[#allocation13] sm:$0x1]
        %v1264 = vlaneseq
        %v1265 = vshrl.u32 %v1264, 7
        %v1266 = vsub.s32 0, %v1265
        %v1267 = vrot.slane %v1262, %v1266
        %v1273 = vunpack.c.l.b16 %v1258
        %v1274 = vunpack.c.l.b16 %v1259
        %v1275 = vunpack.c.l.b16 %v1260
        %v1276 = vunpack.c.l.b16 %v1261
        %v1277 = vpack.c.b16 %v1274, %v1273
        %v1278 = vpack.c.b16 %v1276, %v1275
        %v1282 = vsel %vm1069, %v1257, 0
        %1284 = vmatprep.subr.bf16.mxu0 0
        %1285 = vmatpush1.bf16.msra.mxu0 %v1277
        %1286 = vmatprep.subr.bf16.mxu0 0
        %1287 = vmatpush1.bf16.msra.mxu0 %v1278
        %1288 = vmatprep.subr.bf16.mxu0 0
        %1289 = vmatpush1.bf16.msra.mxu0 0
        %1290 = vmatprep.subr.bf16.mxu0 0
        %1291 = vmatpush1.bf16.msra.mxu0 0
        %1292 = vmatprep.subr.bf16.mxu0 0
        %1293 = vmatpush1.bf16.msra.mxu0 0
        %1294 = vmatprep.subr.bf16.mxu0 0
        %1295 = vmatpush1.bf16.msra.mxu0 0
        %1296 = vmatprep.subr.bf16.mxu0 0
        %1297 = vmatpush1.bf16.msra.mxu0 0
        %1298 = vmatprep.subr.bf16.mxu0 0
        %1299 = vmatpush1.bf16.msra.mxu0 0
        %1300 = vmatprep.subr.bf16.mxu0 0
        %1301 = vmatpush1.bf16.msra.mxu0 0
        %1302 = vmatprep.subr.bf16.mxu0 0
        %1303 = vmatpush1.bf16.msra.mxu0 0
        %1304 = vmatprep.subr.bf16.mxu0 0
        %1305 = vmatpush1.bf16.msra.mxu0 0
        %1306 = vmatprep.subr.bf16.mxu0 0
        %1307 = vmatpush1.bf16.msra.mxu0 0
        %1308 = vmatprep.subr.bf16.mxu0 0
        %1309 = vmatpush1.bf16.msra.mxu0 0
        %1310 = vmatprep.subr.bf16.mxu0 0
        %1311 = vmatpush1.bf16.msra.mxu0 0
        %1312 = vmatprep.subr.bf16.mxu0 0
        %1313 = vmatpush1.bf16.msra.mxu0 0
        %1314 = vmatprep.subr.bf16.mxu0 0
        %1315 = vmatpush1.bf16.msra.mxu0 0
        %1316 = vmatprep.mubr.bf16.mxu0 0
        %1317 = vmatmul.mubr.bf16.gmra.mrb[0].mxu0 %v1282
        %v1318 = vpop.f32.mrb[0].mxu0
        %v1319 = vadd.f32 %v1267, %v1318
        %v1320 = vpop.f32.mrb[0].mxu0
        %v1321 = vpop.f32.mrb[0].mxu0
        %v1322 = vpop.f32.mrb[0].mxu0
        %1323 = vdwg.mxu0
        %v1324 = vld [vmem:[%s11] sm:$0xf]
        %v1325 = vld [vmem:[%s11 + $0x4] sm:$0xf]
        %v1326 = vld [vmem:[%s11 + $0x8] sm:$0xf]
        %v1327 = vld [vmem:[%s11 + $0xc] sm:$0xf]
        %v1328 = vld [vmem:[#allocation14] sm:$0x1]
        %v1330 = vlaneseq
        %v1331 = vshrl.u32 %v1330, 7
        %v1332 = vsub.s32 0, %v1331
        %v1333 = vrot.slane %v1328, %v1332
        %v1339 = vunpack.c.l.b16 %v1324
        %v1340 = vunpack.c.l.b16 %v1325
        %v1341 = vunpack.c.l.b16 %v1326
        %v1342 = vunpack.c.l.b16 %v1327
        %v1343 = vpack.c.b16 %v1340, %v1339
        %v1344 = vpack.c.b16 %v1342, %v1341
        %1347 = vmatprep.subr.bf16.mxu0 0
        %1348 = vmatpush1.bf16.msra.mxu0 %v1343
        %1349 = vmatprep.subr.bf16.mxu0 0
        %1350 = vmatpush1.bf16.msra.mxu0 %v1344
        %1351 = vmatprep.subr.bf16.mxu0 0
        %1352 = vmatpush1.bf16.msra.mxu0 0
        %1353 = vmatprep.subr.bf16.mxu0 0
        %1354 = vmatpush1.bf16.msra.mxu0 0
        %1355 = vmatprep.subr.bf16.mxu0 0
        %1356 = vmatpush1.bf16.msra.mxu0 0
        %1357 = vmatprep.subr.bf16.mxu0 0
        %1358 = vmatpush1.bf16.msra.mxu0 0
        %1359 = vmatprep.subr.bf16.mxu0 0
        %1360 = vmatpush1.bf16.msra.mxu0 0
        %1361 = vmatprep.subr.bf16.mxu0 0
        %1362 = vmatpush1.bf16.msra.mxu0 0
        %1363 = vmatprep.subr.bf16.mxu0 0
        %1364 = vmatpush1.bf16.msra.mxu0 0
        %1365 = vmatprep.subr.bf16.mxu0 0
        %1366 = vmatpush1.bf16.msra.mxu0 0
        %1367 = vmatprep.subr.bf16.mxu0 0
        %1368 = vmatpush1.bf16.msra.mxu0 0
        %1369 = vmatprep.subr.bf16.mxu0 0
        %1370 = vmatpush1.bf16.msra.mxu0 0
        %1371 = vmatprep.subr.bf16.mxu0 0
        %1372 = vmatpush1.bf16.msra.mxu0 0
        %1373 = vmatprep.subr.bf16.mxu0 0
        %1374 = vmatpush1.bf16.msra.mxu0 0
        %1375 = vmatprep.subr.bf16.mxu0 0
        %1376 = vmatpush1.bf16.msra.mxu0 0
        %1377 = vmatprep.subr.bf16.mxu0 0
        %1378 = vmatpush1.bf16.msra.mxu0 0
        %1379 = vmatprep.mubr.bf16.mxu0 0
        %1380 = vmatmul.mubr.bf16.gmra.mrb[0].mxu0 %v1282
        %v1381 = vpop.f32.mrb[0].mxu0
        %v1382 = vadd.f32 %v1333, %v1381
        %v1383 = vpop.f32.mrb[0].mxu0
        %v1384 = vpop.f32.mrb[0].mxu0
        %v1385 = vpop.f32.mrb[0].mxu0
        %1386 = vdwg.mxu0
        %v1387 = vld [vmem:[%s13] sm:$0xf]
        %v1388 = vld [vmem:[%s13 + $0x4] sm:$0xf]
        %v1389 = vld [vmem:[%s13 + $0x8] sm:$0xf]
        %v1390 = vld [vmem:[%s13 + $0xc] sm:$0xf]
        %v1391 = vld [vmem:[#allocation16] sm:$0x1]
        %v1393 = vlaneseq
        %v1394 = vshrl.u32 %v1393, 7
        %v1395 = vsub.s32 0, %v1394
        %v1396 = vrot.slane %v1391, %v1395
        %v1402 = vunpack.c.l.b16 %v1387
        %v1403 = vunpack.c.l.b16 %v1388
        %v1404 = vunpack.c.l.b16 %v1389
        %v1405 = vunpack.c.l.b16 %v1390
        %v1406 = vpack.c.b16 %v1403, %v1402
        %v1407 = vpack.c.b16 %v1405, %v1404
        %1410 = vmatprep.subr.bf16.mxu0 0
        %1411 = vmatpush1.bf16.msra.mxu0 %v1406
        %1412 = vmatprep.subr.bf16.mxu0 0
        %1413 = vmatpush1.bf16.msra.mxu0 %v1407
        %1414 = vmatprep.subr.bf16.mxu0 0
        %1415 = vmatpush1.bf16.msra.mxu0 0
        %1416 = vmatprep.subr.bf16.mxu0 0
        %1417 = vmatpush1.bf16.msra.mxu0 0
        %1418 = vmatprep.subr.bf16.mxu0 0
        %1419 = vmatpush1.bf16.msra.mxu0 0
        %1420 = vmatprep.subr.bf16.mxu0 0
        %1421 = vmatpush1.bf16.msra.mxu0 0
        %1422 = vmatprep.subr.bf16.mxu0 0
        %1423 = vmatpush1.bf16.msra.mxu0 0
        %1424 = vmatprep.subr.bf16.mxu0 0
        %1425 = vmatpush1.bf16.msra.mxu0 0
        %1426 = vmatprep.subr.bf16.mxu0 0
        %1427 = vmatpush1.bf16.msra.mxu0 0
        %1428 = vmatprep.subr.bf16.mxu0 0
        %1429 = vmatpush1.bf16.msra.mxu0 0
        %1430 = vmatprep.subr.bf16.mxu0 0
        %1431 = vmatpush1.bf16.msra.mxu0 0
        %1432 = vmatprep.subr.bf16.mxu0 0
        %1433 = vmatpush1.bf16.msra.mxu0 0
        %1434 = vmatprep.subr.bf16.mxu0 0
        %1435 = vmatpush1.bf16.msra.mxu0 0
        %1436 = vmatprep.subr.bf16.mxu0 0
        %1437 = vmatpush1.bf16.msra.mxu0 0
        %1438 = vmatprep.subr.bf16.mxu0 0
        %1439 = vmatpush1.bf16.msra.mxu0 0
        %1440 = vmatprep.subr.bf16.mxu0 0
        %1441 = vmatpush1.bf16.msra.mxu0 0
        %1442 = vmatprep.mubr.bf16.mxu0 0
        %1443 = vmatmul.mubr.bf16.gmra.mrb[0].mxu0 %v1282
        %v1444 = vpop.f32.mrb[0].mxu0
        %v1445 = vadd.f32 %v1396, %v1444
        %v1446 = vpop.f32.mrb[0].mxu0
        %v1447 = vpop.f32.mrb[0].mxu0
        %v1448 = vpop.f32.mrb[0].mxu0
        %1449 = vdwg.mxu0
        %v1450 = vpack.c.bf16 %v1319, %v1319
        %1452 = vrot.lane.b32.xlu0 %v1450, 120
        %v1453 = vpop.permute.xlu0 %1452
        %1454 = vrot.lane.b32.xlu0 %v1450, 112
        %v1455 = vpop.permute.xlu0 %1454
        %1456 = vrot.lane.b32.xlu0 %v1450, 104
        %v1457 = vpop.permute.xlu0 %1456
        %v1458 = vpack.c.bf16 %v1382, %v1382
        %1460 = vrot.lane.b32.xlu0 %v1458, 120
        %v1461 = vpop.permute.xlu0 %1460
        %1462 = vrot.lane.b32.xlu0 %v1458, 112
        %v1463 = vpop.permute.xlu0 %1462
        %1464 = vrot.lane.b32.xlu0 %v1458, 104
        %v1465 = vpop.permute.xlu0 %1464
        %v1466 = vpack.c.bf16 %v1445, %v1445
        %1468 = vrot.lane.b32.xlu0 %v1466, 120
        %v1469 = vpop.permute.xlu0 %1468
        %1470 = vrot.lane.b32.xlu0 %v1466, 112
        %v1471 = vpop.permute.xlu0 %1470
        %1472 = vrot.lane.b32.xlu0 %v1466, 104
        %v1473 = vpop.permute.xlu0 %1472
        %v1474 = vld [vmem:[%s830] sm:$0xf]
        %v1475 = vunpack.c.l.bf16 %v1474
        %v1477 = vsel %vm950, %v1450, 0
        %v1480 = vsel %vm950, %v1458, 0
        %1482 = vmatprep.subr.bf16.mxu0 0
        %1483 = vmatpush1.bf16.xpose.msra.mxu0 %v1480
        %1484 = vmatprep.subr.bf16.mxu0 0
        %1485 = vmatpush1.bf16.xpose.msra.mxu0 0
        %1486 = vmatprep.subr.bf16.mxu0 0
        %1487 = vmatpush1.bf16.xpose.msra.mxu0 0
        %1488 = vmatprep.subr.bf16.mxu0 0
        %1489 = vmatpush1.bf16.xpose.msra.mxu0 0
        %1490 = vmatprep.subr.bf16.mxu0 0
        %1491 = vmatpush1.bf16.xpose.msra.mxu0 0
        %1492 = vmatprep.subr.bf16.mxu0 0
        %1493 = vmatpush1.bf16.xpose.msra.mxu0 0
        %1494 = vmatprep.subr.bf16.mxu0 0
        %1495 = vmatpush1.bf16.xpose.msra.mxu0 0
        %1496 = vmatprep.subr.bf16.mxu0 0
        %1497 = vmatpush1.bf16.xpose.msra.mxu0 0
        %1498 = vmatprep.subr.bf16.mxu0 0
        %1499 = vmatpush1.bf16.xpose.msra.mxu0 0
        %1500 = vmatprep.subr.bf16.mxu0 0
        %1501 = vmatpush1.bf16.xpose.msra.mxu0 0
        %1502 = vmatprep.subr.bf16.mxu0 0
        %1503 = vmatpush1.bf16.xpose.msra.mxu0 0
        %1504 = vmatprep.subr.bf16.mxu0 0
        %1505 = vmatpush1.bf16.xpose.msra.mxu0 0
        %1506 = vmatprep.subr.bf16.mxu0 0
        %1507 = vmatpush1.bf16.xpose.msra.mxu0 0
        %1508 = vmatprep.subr.bf16.mxu0 0
        %1509 = vmatpush1.bf16.xpose.msra.mxu0 0
        %1510 = vmatprep.subr.bf16.mxu0 0
        %1511 = vmatpush1.bf16.xpose.msra.mxu0 0
        %1512 = vmatprep.subr.bf16.mxu0 0
        %1513 = vmatpush1.bf16.xpose.msra.mxu0 0
        %1514 = vmatprep.mubr.bf16.mxu0 0
        %1515 = vmatmul.mubr.bf16.gmra.mrb[0].mxu0 %v1477
        %v1516 = vpop.f32.mrb[0].mxu0
        %v1517 = vadd.f32 %v1475, %v1516
        %v1518 = vpop.f32.mrb[0].mxu0
        %v1519 = vpop.f32.mrb[0].mxu0
        %v1520 = vpop.f32.mrb[0].mxu0
        %1521 = vdwg.mxu0
        %v1523 = vsel %vm950, %v1453, 0
        %v1526 = vsel %vm950, %v1461, 0
        %1528 = vmatprep.subr.bf16.mxu0 0
        %1529 = vmatpush1.bf16.xpose.msra.mxu0 %v1526
        %1530 = vmatprep.subr.bf16.mxu0 0
        %1531 = vmatpush1.bf16.xpose.msra.mxu0 0
        %1532 = vmatprep.subr.bf16.mxu0 0
        %1533 = vmatpush1.bf16.xpose.msra.mxu0 0
        %1534 = vmatprep.subr.bf16.mxu0 0
        %1535 = vmatpush1.bf16.xpose.msra.mxu0 0
        %1536 = vmatprep.subr.bf16.mxu0 0
        %1537 = vmatpush1.bf16.xpose.msra.mxu0 0
        %1538 = vmatprep.subr.bf16.mxu0 0
        %1539 = vmatpush1.bf16.xpose.msra.mxu0 0
        %1540 = vmatprep.subr.bf16.mxu0 0
        %1541 = vmatpush1.bf16.xpose.msra.mxu0 0
        %1542 = vmatprep.subr.bf16.mxu0 0
        %1543 = vmatpush1.bf16.xpose.msra.mxu0 0
        %1544 = vmatprep.subr.bf16.mxu0 0
        %1545 = vmatpush1.bf16.xpose.msra.mxu0 0
        %1546 = vmatprep.subr.bf16.mxu0 0
        %1547 = vmatpush1.bf16.xpose.msra.mxu0 0
        %1548 = vmatprep.subr.bf16.mxu0 0
        %1549 = vmatpush1.bf16.xpose.msra.mxu0 0
        %1550 = vmatprep.subr.bf16.mxu0 0
        %1551 = vmatpush1.bf16.xpose.msra.mxu0 0
        %1552 = vmatprep.subr.bf16.mxu0 0
        %1553 = vmatpush1.bf16.xpose.msra.mxu0 0
        %1554 = vmatprep.subr.bf16.mxu0 0
        %1555 = vmatpush1.bf16.xpose.msra.mxu0 0
        %1556 = vmatprep.subr.bf16.mxu0 0
        %1557 = vmatpush1.bf16.xpose.msra.mxu0 0
        %1558 = vmatprep.subr.bf16.mxu0 0
        %1559 = vmatpush1.bf16.xpose.msra.mxu0 0
        %1560 = vmatprep.mubr.bf16.mxu0 0
        %1561 = vmatmul.mubr.bf16.gmra.mrb[0].mxu0 %v1523
        %v1562 = vpop.f32.mrb[0].mxu0
        %v1563 = vadd.f32 %v1475, %v1562
        %v1564 = vpop.f32.mrb[0].mxu0
        %v1565 = vpop.f32.mrb[0].mxu0
        %v1566 = vpop.f32.mrb[0].mxu0
        %1567 = vdwg.mxu0
        %v1569 = vsel %vm950, %v1455, 0
        %v1572 = vsel %vm950, %v1463, 0
        %1574 = vmatprep.subr.bf16.mxu0 0
        %1575 = vmatpush1.bf16.xpose.msra.mxu0 %v1572
        %1576 = vmatprep.subr.bf16.mxu0 0
        %1577 = vmatpush1.bf16.xpose.msra.mxu0 0
        %1578 = vmatprep.subr.bf16.mxu0 0
        %1579 = vmatpush1.bf16.xpose.msra.mxu0 0
        %1580 = vmatprep.subr.bf16.mxu0 0
        %1581 = vmatpush1.bf16.xpose.msra.mxu0 0
        %1582 = vmatprep.subr.bf16.mxu0 0
        %1583 = vmatpush1.bf16.xpose.msra.mxu0 0
        %1584 = vmatprep.subr.bf16.mxu0 0
        %1585 = vmatpush1.bf16.xpose.msra.mxu0 0
        %1586 = vmatprep.subr.bf16.mxu0 0
        %1587 = vmatpush1.bf16.xpose.msra.mxu0 0
        %1588 = vmatprep.subr.bf16.mxu0 0
        %1589 = vmatpush1.bf16.xpose.msra.mxu0 0
        %1590 = vmatprep.subr.bf16.mxu0 0
        %1591 = vmatpush1.bf16.xpose.msra.mxu0 0
        %1592 = vmatprep.subr.bf16.mxu0 0
        %1593 = vmatpush1.bf16.xpose.msra.mxu0 0
        %1594 = vmatprep.subr.bf16.mxu0 0
        %1595 = vmatpush1.bf16.xpose.msra.mxu0 0
        %1596 = vmatprep.subr.bf16.mxu0 0
        %1597 = vmatpush1.bf16.xpose.msra.mxu0 0
        %1598 = vmatprep.subr.bf16.mxu0 0
        %1599 = vmatpush1.bf16.xpose.msra.mxu0 0
        %1600 = vmatprep.subr.bf16.mxu0 0
        %1601 = vmatpush1.bf16.xpose.msra.mxu0 0
        %1602 = vmatprep.subr.bf16.mxu0 0
        %1603 = vmatpush1.bf16.xpose.msra.mxu0 0
        %1604 = vmatprep.subr.bf16.mxu0 0
        %1605 = vmatpush1.bf16.xpose.msra.mxu0 0
        %1606 = vmatprep.mubr.bf16.mxu0 0
        %1607 = vmatmul.mubr.bf16.gmra.mrb[0].mxu0 %v1569
        %v1608 = vpop.f32.mrb[0].mxu0
        %v1609 = vadd.f32 %v1475, %v1608
        %v1610 = vpop.f32.mrb[0].mxu0
        %v1611 = vpop.f32.mrb[0].mxu0
        %v1612 = vpop.f32.mrb[0].mxu0
        %1613 = vdwg.mxu0
        %v1615 = vsel %vm950, %v1457, 0
        %v1618 = vsel %vm950, %v1465, 0
        %1620 = vmatprep.subr.bf16.mxu0 0
        %1621 = vmatpush1.bf16.xpose.msra.mxu0 %v1618
        %1622 = vmatprep.subr.bf16.mxu0 0
        %1623 = vmatpush1.bf16.xpose.msra.mxu0 0
        %1624 = vmatprep.subr.bf16.mxu0 0
        %1625 = vmatpush1.bf16.xpose.msra.mxu0 0
        %1626 = vmatprep.subr.bf16.mxu0 0
        %1627 = vmatpush1.bf16.xpose.msra.mxu0 0
        %1628 = vmatprep.subr.bf16.mxu0 0
        %1629 = vmatpush1.bf16.xpose.msra.mxu0 0
        %1630 = vmatprep.subr.bf16.mxu0 0
        %1631 = vmatpush1.bf16.xpose.msra.mxu0 0
        %1632 = vmatprep.subr.bf16.mxu0 0
        %1633 = vmatpush1.bf16.xpose.msra.mxu0 0
        %1634 = vmatprep.subr.bf16.mxu0 0
        %1635 = vmatpush1.bf16.xpose.msra.mxu0 0
        %1636 = vmatprep.subr.bf16.mxu0 0
        %1637 = vmatpush1.bf16.xpose.msra.mxu0 0
        %1638 = vmatprep.subr.bf16.mxu0 0
        %1639 = vmatpush1.bf16.xpose.msra.mxu0 0
        %1640 = vmatprep.subr.bf16.mxu0 0
        %1641 = vmatpush1.bf16.xpose.msra.mxu0 0
        %1642 = vmatprep.subr.bf16.mxu0 0
        %1643 = vmatpush1.bf16.xpose.msra.mxu0 0
        %1644 = vmatprep.subr.bf16.mxu0 0
        %1645 = vmatpush1.bf16.xpose.msra.mxu0 0
        %1646 = vmatprep.subr.bf16.mxu0 0
        %1647 = vmatpush1.bf16.xpose.msra.mxu0 0
        %1648 = vmatprep.subr.bf16.mxu0 0
        %1649 = vmatpush1.bf16.xpose.msra.mxu0 0
        %1650 = vmatprep.subr.bf16.mxu0 0
        %1651 = vmatpush1.bf16.xpose.msra.mxu0 0
        %1652 = vmatprep.mubr.bf16.mxu0 0
        %1653 = vmatmul.mubr.bf16.gmra.mrb[0].mxu0 %v1615
        %v1654 = vpop.f32.mrb[0].mxu0
        %v1655 = vadd.f32 %v1475, %v1654
        %v1656 = vpop.f32.mrb[0].mxu0
        %v1657 = vpop.f32.mrb[0].mxu0
        %v1658 = vpop.f32.mrb[0].mxu0
        %1659 = vdwg.mxu0
        %v1660 = vsel %vm950, %v1517, -inf
        %1661 = vmax.xlane.f32.xlu0 %v1660
        %v1662 = vpop.xlane.xlu0 %1661
        %v1663 = vsel %vm950, %v1563, -inf
        %1664 = vmax.xlane.f32.xlu0 %v1663
        %v1665 = vpop.xlane.xlu0 %1664
        %v1666 = vsel %vm950, %v1609, -inf
        %1667 = vmax.xlane.f32.xlu0 %v1666
        %v1668 = vpop.xlane.xlu0 %1667
        %v1669 = vsel %vm950, %v1655, -inf
        %1670 = vmax.xlane.f32.xlu0 %v1669
        %v1671 = vpop.xlane.xlu0 %1670
        %v1672 = vsub.f32 %v1517, %v1662
        %v1673 = vsub.f32 %v1563, %v1665
        %v1674 = vsub.f32 %v1609, %v1668
        %v1675 = vsub.f32 %v1655, %v1671
        %v1676 = vmul.f32 %v1672, 1.442695
        %v1677 = vpow.pop %v1676
        %v1678 = vmul.f32 %v1673, 1.442695
        %v1679 = vpow.pop %v1678
        %v1680 = vmul.f32 %v1674, 1.442695
        %v1681 = vpow.pop %v1680
        %v1682 = vmul.f32 %v1675, 1.442695
        %v1683 = vpow.pop %v1682
        %v1684 = vsel %vm950, %v1677, 0.0
        %1685 = vadd.xlane.f32.xlu0 %v1684
        %v1686 = vpop.xlane.xlu0 %1685
        %v1687 = vsel %vm950, %v1679, 0.0
        %1688 = vadd.xlane.f32.xlu0 %v1687
        %v1689 = vpop.xlane.xlu0 %1688
        %v1690 = vsel %vm950, %v1681, 0.0
        %1691 = vadd.xlane.f32.xlu0 %v1690
        %v1692 = vpop.xlane.xlu0 %1691
        %v1693 = vsel %vm950, %v1683, 0.0
        %1694 = vadd.xlane.f32.xlu0 %v1693
        %v1695 = vpop.xlane.xlu0 %1694
        %v1696 = vrcp.pop %v1686
        %v1697 = vrcp.pop %v1689
        %v1698 = vrcp.pop %v1692
        %v1699 = vrcp.pop %v1695
        %v1700 = vmul.f32 %v1677, %v1696
        %v1701 = vmul.f32 %v1679, %v1697
        %v1702 = vmul.f32 %v1681, %v1698
        %v1703 = vmul.f32 %v1683, %v1699
        %v1704 = vpack.c.bf16 %v1700, %v1700
        %v1705 = vpack.c.bf16 %v1701, %v1701
        %v1706 = vpack.c.bf16 %v1702, %v1702
        %v1707 = vpack.c.bf16 %v1703, %v1703
        %v1709 = vsel %vm950, %v1704, 0
        %v1712 = vsel %vm1001, %v1466, 0
        %1714 = vmatprep.subr.bf16.mxu0 0
        %1715 = vmatpush1.bf16.msra.mxu0 %v1712
        %1716 = vmatprep.subr.bf16.mxu0 0
        %1717 = vmatpush1.bf16.msra.mxu0 0
        %1718 = vmatprep.subr.bf16.mxu0 0
        %1719 = vmatpush1.bf16.msra.mxu0 0
        %1720 = vmatprep.subr.bf16.mxu0 0
        %1721 = vmatpush1.bf16.msra.mxu0 0
        %1722 = vmatprep.subr.bf16.mxu0 0
        %1723 = vmatpush1.bf16.msra.mxu0 0
        %1724 = vmatprep.subr.bf16.mxu0 0
        %1725 = vmatpush1.bf16.msra.mxu0 0
        %1726 = vmatprep.subr.bf16.mxu0 0
        %1727 = vmatpush1.bf16.msra.mxu0 0
        %1728 = vmatprep.subr.bf16.mxu0 0
        %1729 = vmatpush1.bf16.msra.mxu0 0
        %1730 = vmatprep.subr.bf16.mxu0 0
        %1731 = vmatpush1.bf16.msra.mxu0 0
        %1732 = vmatprep.subr.bf16.mxu0 0
        %1733 = vmatpush1.bf16.msra.mxu0 0
        %1734 = vmatprep.subr.bf16.mxu0 0
        %1735 = vmatpush1.bf16.msra.mxu0 0
        %1736 = vmatprep.subr.bf16.mxu0 0
        %1737 = vmatpush1.bf16.msra.mxu0 0
        %1738 = vmatprep.subr.bf16.mxu0 0
        %1739 = vmatpush1.bf16.msra.mxu0 0
        %1740 = vmatprep.subr.bf16.mxu0 0
        %1741 = vmatpush1.bf16.msra.mxu0 0
        %1742 = vmatprep.subr.bf16.mxu0 0
        %1743 = vmatpush1.bf16.msra.mxu0 0
        %1744 = vmatprep.subr.bf16.mxu0 0
        %1745 = vmatpush1.bf16.msra.mxu0 0
        %1746 = vmatprep.mubr.bf16.mxu0 0
        %1747 = vmatmul.mubr.bf16.gmra.mrb[0].mxu0 %v1709
        %v1748 = vpop.f32.mrb[0].mxu0
        %v1749 = vadd.f32 0.0, %v1748
        %v1750 = vpop.f32.mrb[0].mxu0
        %v1751 = vpop.f32.mrb[0].mxu0
        %v1752 = vpop.f32.mrb[0].mxu0
        %1753 = vdwg.mxu0
        %v1755 = vsel %vm950, %v1705, 0
        %v1758 = vsel %vm1001, %v1469, 0
        %1760 = vmatprep.subr.bf16.mxu0 0
        %1761 = vmatpush1.bf16.msra.mxu0 %v1758
        %1762 = vmatprep.subr.bf16.mxu0 0
        %1763 = vmatpush1.bf16.msra.mxu0 0
        %1764 = vmatprep.subr.bf16.mxu0 0
        %1765 = vmatpush1.bf16.msra.mxu0 0
        %1766 = vmatprep.subr.bf16.mxu0 0
        %1767 = vmatpush1.bf16.msra.mxu0 0
        %1768 = vmatprep.subr.bf16.mxu0 0
        %1769 = vmatpush1.bf16.msra.mxu0 0
        %1770 = vmatprep.subr.bf16.mxu0 0
        %1771 = vmatpush1.bf16.msra.mxu0 0
        %1772 = vmatprep.subr.bf16.mxu0 0
        %1773 = vmatpush1.bf16.msra.mxu0 0
        %1774 = vmatprep.subr.bf16.mxu0 0
        %1775 = vmatpush1.bf16.msra.mxu0 0
        %1776 = vmatprep.subr.bf16.mxu0 0
        %1777 = vmatpush1.bf16.msra.mxu0 0
        %1778 = vmatprep.subr.bf16.mxu0 0
        %1779 = vmatpush1.bf16.msra.mxu0 0
        %1780 = vmatprep.subr.bf16.mxu0 0
        %1781 = vmatpush1.bf16.msra.mxu0 0
        %1782 = vmatprep.subr.bf16.mxu0 0
        %1783 = vmatpush1.bf16.msra.mxu0 0
        %1784 = vmatprep.subr.bf16.mxu0 0
        %1785 = vmatpush1.bf16.msra.mxu0 0
        %1786 = vmatprep.subr.bf16.mxu0 0
        %1787 = vmatpush1.bf16.msra.mxu0 0
        %1788 = vmatprep.subr.bf16.mxu0 0
        %1789 = vmatpush1.bf16.msra.mxu0 0
        %1790 = vmatprep.subr.bf16.mxu0 0
        %1791 = vmatpush1.bf16.msra.mxu0 0
        %1792 = vmatprep.mubr.bf16.mxu0 0
        %1793 = vmatmul.mubr.bf16.gmra.mrb[0].mxu0 %v1755
        %v1794 = vpop.f32.mrb[0].mxu0
        %v1795 = vadd.f32 0.0, %v1794
        %v1796 = vpop.f32.mrb[0].mxu0
        %v1797 = vpop.f32.mrb[0].mxu0
        %v1798 = vpop.f32.mrb[0].mxu0
        %1799 = vdwg.mxu0
        %v1801 = vsel %vm950, %v1706, 0
        %v1804 = vsel %vm1001, %v1471, 0
        %1806 = vmatprep.subr.bf16.mxu0 0
        %1807 = vmatpush1.bf16.msra.mxu0 %v1804
        %1808 = vmatprep.subr.bf16.mxu0 0
        %1809 = vmatpush1.bf16.msra.mxu0 0
        %1810 = vmatprep.subr.bf16.mxu0 0
        %1811 = vmatpush1.bf16.msra.mxu0 0
        %1812 = vmatprep.subr.bf16.mxu0 0
        %1813 = vmatpush1.bf16.msra.mxu0 0
        %1814 = vmatprep.subr.bf16.mxu0 0
        %1815 = vmatpush1.bf16.msra.mxu0 0
        %1816 = vmatprep.subr.bf16.mxu0 0
        %1817 = vmatpush1.bf16.msra.mxu0 0
        %1818 = vmatprep.subr.bf16.mxu0 0
        %1819 = vmatpush1.bf16.msra.mxu0 0
        %1820 = vmatprep.subr.bf16.mxu0 0
        %1821 = vmatpush1.bf16.msra.mxu0 0
        %1822 = vmatprep.subr.bf16.mxu0 0
        %1823 = vmatpush1.bf16.msra.mxu0 0
        %1824 = vmatprep.subr.bf16.mxu0 0
        %1825 = vmatpush1.bf16.msra.mxu0 0
        %1826 = vmatprep.subr.bf16.mxu0 0
        %1827 = vmatpush1.bf16.msra.mxu0 0
        %1828 = vmatprep.subr.bf16.mxu0 0
        %1829 = vmatpush1.bf16.msra.mxu0 0
        %1830 = vmatprep.subr.bf16.mxu0 0
        %1831 = vmatpush1.bf16.msra.mxu0 0
        %1832 = vmatprep.subr.bf16.mxu0 0
        %1833 = vmatpush1.bf16.msra.mxu0 0
        %1834 = vmatprep.subr.bf16.mxu0 0
        %1835 = vmatpush1.bf16.msra.mxu0 0
        %1836 = vmatprep.subr.bf16.mxu0 0
        %1837 = vmatpush1.bf16.msra.mxu0 0
        %1838 = vmatprep.mubr.bf16.mxu0 0
        %1839 = vmatmul.mubr.bf16.gmra.mrb[0].mxu0 %v1801
        %v1840 = vpop.f32.mrb[0].mxu0
        %v1841 = vadd.f32 0.0, %v1840
        %v1842 = vpop.f32.mrb[0].mxu0
        %v1843 = vpop.f32.mrb[0].mxu0
        %v1844 = vpop.f32.mrb[0].mxu0
        %1845 = vdwg.mxu0
        %v1847 = vsel %vm950, %v1707, 0
        %v1850 = vsel %vm1001, %v1473, 0
        %1852 = vmatprep.subr.bf16.mxu0 0
        %1853 = vmatpush1.bf16.msra.mxu0 %v1850
        %1854 = vmatprep.subr.bf16.mxu0 0
        %1855 = vmatpush1.bf16.msra.mxu0 0
        %1856 = vmatprep.subr.bf16.mxu0 0
        %1857 = vmatpush1.bf16.msra.mxu0 0
        %1858 = vmatprep.subr.bf16.mxu0 0
        %1859 = vmatpush1.bf16.msra.mxu0 0
        %1860 = vmatprep.subr.bf16.mxu0 0
        %1861 = vmatpush1.bf16.msra.mxu0 0
        %1862 = vmatprep.subr.bf16.mxu0 0
        %1863 = vmatpush1.bf16.msra.mxu0 0
        %1864 = vmatprep.subr.bf16.mxu0 0
        %1865 = vmatpush1.bf16.msra.mxu0 0
        %1866 = vmatprep.subr.bf16.mxu0 0
        %1867 = vmatpush1.bf16.msra.mxu0 0
        %1868 = vmatprep.subr.bf16.mxu0 0
        %1869 = vmatpush1.bf16.msra.mxu0 0
        %1870 = vmatprep.subr.bf16.mxu0 0
        %1871 = vmatpush1.bf16.msra.mxu0 0
        %1872 = vmatprep.subr.bf16.mxu0 0
        %1873 = vmatpush1.bf16.msra.mxu0 0
        %1874 = vmatprep.subr.bf16.mxu0 0
        %1875 = vmatpush1.bf16.msra.mxu0 0
        %1876 = vmatprep.subr.bf16.mxu0 0
        %1877 = vmatpush1.bf16.msra.mxu0 0
        %1878 = vmatprep.subr.bf16.mxu0 0
        %1879 = vmatpush1.bf16.msra.mxu0 0
        %1880 = vmatprep.subr.bf16.mxu0 0
        %1881 = vmatpush1.bf16.msra.mxu0 0
        %1882 = vmatprep.subr.bf16.mxu0 0
        %1883 = vmatpush1.bf16.msra.mxu0 0
        %1884 = vmatprep.mubr.bf16.mxu0 0
        %1885 = vmatmul.mubr.bf16.gmra.mrb[0].mxu0 %v1847
        %v1886 = vpop.f32.mrb[0].mxu0
        %v1887 = vadd.f32 0.0, %v1886
        %v1888 = vpop.f32.mrb[0].mxu0
        %v1889 = vpop.f32.mrb[0].mxu0
        %v1890 = vpop.f32.mrb[0].mxu0
        %1891 = vdwg.mxu0
        %1893 = vrot.lane.b32.xlu0 %v1795, 8
        %v1894 = vpop.permute.xlu0 %1893
        %1897 = vrot.lane.b32.xlu0 %v1841, 16
        %v1898 = vpop.permute.xlu0 %1897
        %1901 = vrot.lane.b32.xlu0 %v1887, 24
        %v1902 = vpop.permute.xlu0 %1901
        %v1904 = vsel %vm950, %v1749, %v1894
        %vm1905 = vcmask 130048
        %v1906 = vsel %vm1905, %v1904, %v1898
        %vm1907 = vcmask 195584
        %v1908 = vsel %vm1907, %v1906, %v1902
        %v1909 = vpack.c.bf16 %v1908, %v1908
        %v1910 = vld [vmem:[%s15] sm:$0xf]
        %v1911 = vld [vmem:[%s15 + $0x4] sm:$0xf]
        %v1912 = vld [vmem:[%s15 + $0x8] sm:$0xf]
        %v1913 = vld [vmem:[%s15 + $0xc] sm:$0xf]
        %v1914 = vld [vmem:[#allocation17] sm:$0x1]
        %v1916 = vlaneseq
        %v1917 = vshrl.u32 %v1916, 7
        %v1918 = vsub.s32 0, %v1917
        %v1919 = vrot.slane %v1914, %v1918
        %v1925 = vunpack.c.l.b16 %v1910
        %v1926 = vunpack.c.l.b16 %v1911
        %v1927 = vunpack.c.l.b16 %v1912
        %v1928 = vunpack.c.l.b16 %v1913
        %v1929 = vpack.c.b16 %v1926, %v1925
        %v1930 = vpack.c.b16 %v1928, %v1927
        %v1934 = vsel %vm1069, %v1909, 0
        %1936 = vmatprep.subr.bf16.mxu0 0
        %1937 = vmatpush1.bf16.msra.mxu0 %v1929
        %1938 = vmatprep.subr.bf16.mxu0 0
        %1939 = vmatpush1.bf16.msra.mxu0 %v1930
        %1940 = vmatprep.subr.bf16.mxu0 0
        %1941 = vmatpush1.bf16.msra.mxu0 0
        %1942 = vmatprep.subr.bf16.mxu0 0
        %1943 = vmatpush1.bf16.msra.mxu0 0
        %1944 = vmatprep.subr.bf16.mxu0 0
        %1945 = vmatpush1.bf16.msra.mxu0 0
        %1946 = vmatprep.subr.bf16.mxu0 0
        %1947 = vmatpush1.bf16.msra.mxu0 0
        %1948 = vmatprep.subr.bf16.mxu0 0
        %1949 = vmatpush1.bf16.msra.mxu0 0
        %1950 = vmatprep.subr.bf16.mxu0 0
        %1951 = vmatpush1.bf16.msra.mxu0 0
        %1952 = vmatprep.subr.bf16.mxu0 0
        %1953 = vmatpush1.bf16.msra.mxu0 0
        %1954 = vmatprep.subr.bf16.mxu0 0
        %1955 = vmatpush1.bf16.msra.mxu0 0
        %1956 = vmatprep.subr.bf16.mxu0 0
        %1957 = vmatpush1.bf16.msra.mxu0 0
        %1958 = vmatprep.subr.bf16.mxu0 0
        %1959 = vmatpush1.bf16.msra.mxu0 0
        %1960 = vmatprep.subr.bf16.mxu0 0
        %1961 = vmatpush1.bf16.msra.mxu0 0
        %1962 = vmatprep.subr.bf16.mxu0 0
        %1963 = vmatpush1.bf16.msra.mxu0 0
        %1964 = vmatprep.subr.bf16.mxu0 0
        %1965 = vmatpush1.bf16.msra.mxu0 0
        %1966 = vmatprep.subr.bf16.mxu0 0
        %1967 = vmatpush1.bf16.msra.mxu0 0
        %1968 = vmatprep.mubr.bf16.mxu0 0
        %1969 = vmatmul.mubr.bf16.gmra.mrb[0].mxu0 %v1934
        %v1970 = vpop.f32.mrb[0].mxu0
        %v1971 = vadd.f32 %v1919, %v1970
        %v1972 = vpop.f32.mrb[0].mxu0
        %v1973 = vpop.f32.mrb[0].mxu0
        %v1974 = vpop.f32.mrb[0].mxu0
        %1975 = vdwg.mxu0
        %v1976 = vadd.f32 %v1256, %v1971
        %v1977 = vld [vmem:[#allocation19] sm:$0x1]
        %v1978 = vld [vmem:[%s18] sm:$0x1]
        %v1979 = vsel %vm1069, %v1976, 0.0
        %1980 = vadd.xlane.f32.xlu0 %v1979
        %v1981 = vpop.xlane.xlu0 %1980
        %v1982 = vmul.f32 %v1981, %v1232
        %v1983 = vsub.f32 %v1976, %v1982
        %v1984 = vmul.f32 %v1983, %v1983
        %v1985 = vsel %vm1069, %v1984, 0.0
        %1986 = vadd.xlane.f32.xlu0 %v1985
        %v1987 = vpop.xlane.xlu0 %1986
        %v1988 = vmul.f32 %v1987, %v1232
        %v1989 = vadd.f32 %v1988, 1e-05
        %v1990 = vrsqrt.pop %v1989
        %v1991 = vmul.f32 %v1983, %v1990
        %v1993 = vlaneseq
        %v1994 = vshrl.u32 %v1993, 7
        %v1995 = vsub.s32 0, %v1994
        %v1996 = vrot.slane %v1977, %v1995
        %v1998 = vmul.f32 %v1991, %v1996
        %v2000 = vlaneseq
        %v2001 = vshrl.u32 %v2000, 7
        %v2002 = vsub.s32 0, %v2001
        %v2003 = vrot.slane %v1978, %v2002
        %v2005 = vadd.f32 %v1998, %v2003
        %v2006 = vpack.c.bf16 %v2005, %v2005
        %v2007 = vld [vmem:[%s19] sm:$0xf]
        %v2008 = vld [vmem:[%s19 + $0x4] sm:$0xf]
        %v2009 = vld [vmem:[%s19 + $0x8] sm:$0xf]
        %v2010 = vld [vmem:[%s19 + $0xc] sm:$0xf]
        %v2011 = vld [vmem:[%s20] sm:$0x1]
        %v2013 = vlaneseq
        %v2014 = vshrl.u32 %v2013, 7
        %v2015 = vsub.s32 0, %v2014
        %v2016 = vrot.slane %v2011, %v2015
        %v2022 = vunpack.c.l.b16 %v2007
        %v2023 = vunpack.c.l.b16 %v2008
        %v2024 = vunpack.c.l.b16 %v2009
        %v2025 = vunpack.c.l.b16 %v2010
        %v2026 = vpack.c.b16 %v2023, %v2022
        %v2027 = vpack.c.b16 %v2025, %v2024
        %v2031 = vsel %vm1069, %v2006, 0
        %2033 = vmatprep.subr.bf16.mxu0 0
        %2034 = vmatpush1.bf16.msra.mxu0 %v2026
        %2035 = vmatprep.subr.bf16.mxu0 0
        %2036 = vmatpush1.bf16.msra.mxu0 %v2027
        %2037 = vmatprep.subr.bf16.mxu0 0
        %2038 = vmatpush1.bf16.msra.mxu0 0
        %2039 = vmatprep.subr.bf16.mxu0 0
        %2040 = vmatpush1.bf16.msra.mxu0 0
        %2041 = vmatprep.subr.bf16.mxu0 0
        %2042 = vmatpush1.bf16.msra.mxu0 0
        %2043 = vmatprep.subr.bf16.mxu0 0
        %2044 = vmatpush1.bf16.msra.mxu0 0
        %2045 = vmatprep.subr.bf16.mxu0 0
        %2046 = vmatpush1.bf16.msra.mxu0 0
        %2047 = vmatprep.subr.bf16.mxu0 0
        %2048 = vmatpush1.bf16.msra.mxu0 0
        %2049 = vmatprep.subr.bf16.mxu0 0
        %2050 = vmatpush1.bf16.msra.mxu0 0
        %2051 = vmatprep.subr.bf16.mxu0 0
        %2052 = vmatpush1.bf16.msra.mxu0 0
        %2053 = vmatprep.subr.bf16.mxu0 0
        %2054 = vmatpush1.bf16.msra.mxu0 0
        %2055 = vmatprep.subr.bf16.mxu0 0
        %2056 = vmatpush1.bf16.msra.mxu0 0
        %2057 = vmatprep.subr.bf16.mxu0 0
        %2058 = vmatpush1.bf16.msra.mxu0 0
        %2059 = vmatprep.subr.bf16.mxu0 0
        %2060 = vmatpush1.bf16.msra.mxu0 0
        %2061 = vmatprep.subr.bf16.mxu0 0
        %2062 = vmatpush1.bf16.msra.mxu0 0
        %2063 = vmatprep.subr.bf16.mxu0 0
        %2064 = vmatpush1.bf16.msra.mxu0 0
        %2065 = vmatprep.mubr.bf16.mxu0 0
        %2066 = vmatmul.mubr.bf16.gmra.mrb[0].mxu0 %v2031
        %v2067 = vpop.f32.mrb[0].mxu0
        %v2068 = vadd.f32 %v2016, %v2067
        %v2069 = vpop.f32.mrb[0].mxu0
        %v2070 = vpop.f32.mrb[0].mxu0
        %v2071 = vpop.f32.mrb[0].mxu0
        %2072 = vdwg.mxu0
        %v2073 = vmax.f32 %v2068, 0.0
        %v2074 = vpack.c.bf16 %v2073, %v2073
        %v2075 = vld [vmem:[%s21] sm:$0xf]
        %v2076 = vld [vmem:[%s21 + $0x4] sm:$0xf]
        %v2077 = vld [vmem:[%s21 + $0x8] sm:$0xf]
        %v2078 = vld [vmem:[%s21 + $0xc] sm:$0xf]
        %v2079 = vld [vmem:[%s21 + $0x10] sm:$0xf]
        %v2080 = vld [vmem:[%s21 + $0x14] sm:$0xf]
        %v2081 = vld [vmem:[%s21 + $0x18] sm:$0xf]
        %v2082 = vld [vmem:[%s21 + $0x1c] sm:$0xf]
        %v2083 = vld [vmem:[%s21 + $0x20] sm:$0xf]
        %v2084 = vld [vmem:[%s21 + $0x24] sm:$0xf]
        %v2085 = vld [vmem:[%s21 + $0x28] sm:$0xf]
        %v2086 = vld [vmem:[%s21 + $0x2c] sm:$0xf]
        %v2087 = vld [vmem:[%s21 + $0x30] sm:$0xf]
        %v2088 = vld [vmem:[%s21 + $0x34] sm:$0xf]
        %v2089 = vld [vmem:[%s21 + $0x38] sm:$0xf]
        %v2090 = vld [vmem:[%s21 + $0x3c] sm:$0xf]
        %v2091 = vld [vmem:[%s22] sm:$0x1]
        %v2093 = vlaneseq
        %v2094 = vshrl.u32 %v2093, 7
        %v2095 = vsub.s32 0, %v2094
        %v2096 = vrot.slane %v2091, %v2095
        %v2114 = vunpack.c.l.b16 %v2075
        %v2115 = vunpack.c.l.b16 %v2076
        %v2116 = vunpack.c.l.b16 %v2077
        %v2117 = vunpack.c.l.b16 %v2078
        %v2118 = vunpack.c.l.b16 %v2079
        %v2119 = vunpack.c.l.b16 %v2080
        %v2120 = vunpack.c.l.b16 %v2081
        %v2121 = vunpack.c.l.b16 %v2082
        %v2122 = vunpack.c.l.b16 %v2083
        %v2123 = vunpack.c.l.b16 %v2084
        %v2124 = vunpack.c.l.b16 %v2085
        %v2125 = vunpack.c.l.b16 %v2086
        %v2126 = vunpack.c.l.b16 %v2087
        %v2127 = vunpack.c.l.b16 %v2088
        %v2128 = vunpack.c.l.b16 %v2089
        %v2129 = vunpack.c.l.b16 %v2090
        %v2130 = vpack.c.b16 %v2115, %v2114
        %v2131 = vpack.c.b16 %v2117, %v2116
        %v2132 = vpack.c.b16 %v2119, %v2118
        %v2133 = vpack.c.b16 %v2121, %v2120
        %v2134 = vpack.c.b16 %v2123, %v2122
        %v2135 = vpack.c.b16 %v2125, %v2124
        %v2136 = vpack.c.b16 %v2127, %v2126
        %v2137 = vpack.c.b16 %v2129, %v2128
        %2146 = vmatprep.subr.bf16.mxu0 0
        %2147 = vmatpush1.bf16.msra.mxu0 %v2130
        %2148 = vmatprep.subr.bf16.mxu0 0
        %2149 = vmatpush1.bf16.msra.mxu0 %v2131
        %2150 = vmatprep.subr.bf16.mxu0 0
        %2151 = vmatpush1.bf16.msra.mxu0 %v2132
        %2152 = vmatprep.subr.bf16.mxu0 0
        %2153 = vmatpush1.bf16.msra.mxu0 %v2133
        %2154 = vmatprep.subr.bf16.mxu0 0
        %2155 = vmatpush1.bf16.msra.mxu0 %v2134
        %2156 = vmatprep.subr.bf16.mxu0 0
        %2157 = vmatpush1.bf16.msra.mxu0 %v2135
        %2158 = vmatprep.subr.bf16.mxu0 0
        %2159 = vmatpush1.bf16.msra.mxu0 %v2136
        %2160 = vmatprep.subr.bf16.mxu0 0
        %2161 = vmatpush1.bf16.msra.mxu0 %v2137
        %2162 = vmatprep.subr.bf16.mxu0 0
        %2163 = vmatpush1.bf16.msra.mxu0 0
        %2164 = vmatprep.subr.bf16.mxu0 0
        %2165 = vmatpush1.bf16.msra.mxu0 0
        %2166 = vmatprep.subr.bf16.mxu0 0
        %2167 = vmatpush1.bf16.msra.mxu0 0
        %2168 = vmatprep.subr.bf16.mxu0 0
        %2169 = vmatpush1.bf16.msra.mxu0 0
        %2170 = vmatprep.subr.bf16.mxu0 0
        %2171 = vmatpush1.bf16.msra.mxu0 0
        %2172 = vmatprep.subr.bf16.mxu0 0
        %2173 = vmatpush1.bf16.msra.mxu0 0
        %2174 = vmatprep.subr.bf16.mxu0 0
        %2175 = vmatpush1.bf16.msra.mxu0 0
        %2176 = vmatprep.subr.bf16.mxu0 0
        %2177 = vmatpush1.bf16.msra.mxu0 0
        %2178 = vmatprep.mubr.bf16.mxu0 0
        %2179 = vmatmul.mubr.bf16.gmra.mrb[0].mxu0 %v2074
        %v2180 = vpop.f32.mrb[0].mxu0
        %v2181 = vadd.f32 %v2096, %v2180
        %v2182 = vpop.f32.mrb[0].mxu0
        %v2183 = vpop.f32.mrb[0].mxu0
        %v2184 = vpop.f32.mrb[0].mxu0
        %2185 = vdwg.mxu0
        %v2186 = vadd.f32 %v2005, %v2181
        %v2187 = vld [vmem:[%s23] sm:$0x1]
        %v2188 = vld [vmem:[%s24] sm:$0x1]
        %v2189 = vsel %vm1069, %v2186, 0.0
        %2190 = vadd.xlane.f32.xlu0 %v2189
        %v2191 = vpop.xlane.xlu0 %2190
        %v2192 = vmul.f32 %v2191, %v1232
        %v2193 = vsub.f32 %v2186, %v2192
        %v2194 = vmul.f32 %v2193, %v2193
        %v2195 = vsel %vm1069, %v2194, 0.0
        %2196 = vadd.xlane.f32.xlu0 %v2195
        %v2197 = vpop.xlane.xlu0 %2196
        %v2198 = vmul.f32 %v2197, %v1232
        %v2199 = vadd.f32 %v2198, 1e-05
        %v2200 = vrsqrt.pop %v2199
        %v2201 = vmul.f32 %v2193, %v2200
        %v2203 = vlaneseq
        %v2204 = vshrl.u32 %v2203, 7
        %v2205 = vsub.s32 0, %v2204
        %v2206 = vrot.slane %v2187, %v2205
        %v2208 = vmul.f32 %v2201, %v2206
        %v2210 = vlaneseq
        %v2211 = vshrl.u32 %v2210, 7
        %v2212 = vsub.s32 0, %v2211
        %v2213 = vrot.slane %v2188, %v2212
        %v2215 = vadd.f32 %v2208, %v2213
        %2216 = vst.msk [vmem:[%s941] sm:$0xff] %vm1069, %v2215
        %s2217 = sand.u32 %s597, 1
        %s2218 = scalar_lea.sflag [#allocation4], %s2217
        %s2219 = sand.u32 %s597, 1
        %s2220 = smul.addr %s2219, 8
        %s2221 = scalar_lea.vmem [#allocation20], %s2220
        // Predicated region
        $region165: #{tpu_custom_call.1} parent=119 // pred_check
          %p2222 = pneg %p607
        $region166: #{tpu_custom_call.1} parent=119 // pred_check_branch
          %2224 = sbr.rel (%p2222) target = $region168
        $region167: #{tpu_custom_call.1} parent=119 // pred_region
          %s2226 = ssub.s32 128, 128
          %2227 = vsyncadd %s2218, %s2226
          %s2228 = smul.addr %s49, 128
          %s2229 = scalar_lea.hbm %s25, %s2228
          %s2231 = sshll.u32 %s2221, 4
          %s2232 = int_to_ptr.vmem [resolvable:$true] %s2231
          %2234 = dma.vmem_to_hbm [thread:$0]  %s2232, 128, %s2229, %s2218
        $region168: #{tpu_custom_call.1} parent=119 // pred_fallthru
          _
      $region120: #{tpu_custom_call.1} parent=5 // pred_fallthru
        _
      %p2235 = scmp.le.s32.totalorder 2, %s44
      // Predicated region
      $region169: #{tpu_custom_call.1} parent=5 // pred_check
        %p2236 = pneg %p2235
      $region170: #{tpu_custom_call.1} parent=5 // pred_check_branch
        %2238 = sbr.rel (%p2236) target = $region172
      $region171: #{tpu_custom_call.1} parent=5 // pred_region
        %s2239 = ssub.s32 %s44, 2
        // Predicated region
        $region173: #{tpu_custom_call.1} parent=171 // pred_check
          %p2240 = pneg %p613
        $region174: #{tpu_custom_call.1} parent=171 // pred_check_branch
          %2242 = sbr.rel (%p2240) target = $region176
        $region175: #{tpu_custom_call.1} parent=171 // pred_region
          %s2243 = sand.u32 %s598, 1
          %s2244 = scalar_lea.sflag [#allocation4], %s2243
          %s2245 = sand.u32 %s598, 1
          %s2246 = smul.addr %s2245, 8
          %s2247 = scalar_lea.vmem [#allocation20], %s2246
          %2248 = dma.done %s2244, 128
        $region176: #{tpu_custom_call.1} parent=171 // pred_fallthru
          _
      $region172: #{tpu_custom_call.1} parent=5 // pred_fallthru
        _
    $region6: #{tpu_custom_call.1} parent=1 // loop_footer
      %s48 = sadd.s32 1, %s44
    $region7: #{tpu_custom_call.1} parent=1 // loop_footer_branch
      %43 = sbr.rel target = $region3
    $region8: #{tpu_custom_call.1} parent=1 // loop_exit
      _
    %2249 = vsyncpa [#allocation3], 1
    %s2250 = scalar_lea.sflag [#allocation3], 1
    %2251 = vsyncpa %s2250, 1
    %2252 = vsyncpa [#allocation6], 1
    %s2253 = scalar_lea.sflag [#allocation6], 1
    %2254 = vsyncpa %s2253, 1
    %2255 = vsyncpa [#allocation9], 1
    %2256 = vsyncpa [#allocation12], 1
    %2257 = vsyncpa [#allocation15], 1
    %2258 = vsyncpa [#allocation18], 1
    %2259 = vsyncpa [#allocation4], 1
    %s2260 = scalar_lea.sflag [#allocation4], 1
    %2261 = vsyncpa %s2260, 1

</llo_original>
